<compile_context>
chip_gen: v7x
topology: tpu7x:2x2x1
jax: 0.10.0
libtpu: 0.0.40
codegen_flags: <defaults>
</compile_context>

<pallas_src>
import functools
import math

import jax
import jax.numpy as jnp
from jax.experimental import pallas as pl
from jax.experimental.pallas import tpu as pltpu


N_BITS = 8
QMAX = float(2 ** N_BITS - 1)

# ----------------------------------------------------------------------------
# model dimensions (synthetic UNet-like model that QuantModel wraps)
# ----------------------------------------------------------------------------
IN_CH = 4         # config.in_channels
SAMPLE = 16       # config.sample_size
C = 32            # base block channels
T_PROJ = 32       # time_proj dim
T_EMB = 64        # time_embedding dim
X_DIM = 32        # cross-attention (encoder_hidden_states) dim
SEQ = 8           # encoder_hidden_states length


# ----------------------------------------------------------------------------
# quantization helpers (init / calibration time only -- plain JAX)
# ----------------------------------------------------------------------------
def quant_params(x):
    x_min = jnp.minimum(jnp.min(x), 0.0)
    x_max = jnp.maximum(jnp.max(x), 0.0)
    delta = jnp.maximum((x_max - x_min) / QMAX, 1e-8)
    zp = jnp.round(-x_min / delta)
    return delta.astype(jnp.float32), zp.astype(jnp.float32)


def _dz_array(x):
    d, z = quant_params(x)
    return jnp.stack([d, z]).reshape(1, 2)


def fake_quant_weight(w):
    # QuantLayer weight quantizer (use_wq=True): per-tensor uniform affine,
    # applied once at init (not a forward-path op, so plain JAX is fine).
    d, z = quant_params(w)
    return ((jnp.clip(jnp.round(w / d) + z, 0.0, QMAX) - z) * d).astype(jnp.float32)


def _fq_jnp(x, scal):
    d = scal[0, 0]
    z = scal[0, 1]
    return (jnp.clip(jnp.round(x / d) + z, 0.0, QMAX) - z) * d


_NO_QUANT = jnp.zeros((1, 2), jnp.float32)  # placeholder when quant_act=False


# ----------------------------------------------------------------------------
# Pallas kernel 1: fused [LayerNorm] -> [act fake-quant] -> bf16 matmul ->
#                  +bias -> [SiLU/GELU] -> [+residual]  (Linear layers)
# ----------------------------------------------------------------------------
def _linear_kernel(*refs, act, quant_act, use_ln, add_res):
    it = iter(refs)
    x_ref = next(it)
    w_ref = next(it)
    b_ref = next(it)
    s_ref = next(it)
    ln_g_ref = next(it) if use_ln else None
    ln_b_ref = next(it) if use_ln else None
    res_ref = next(it) if add_res else None
    o_ref = next(it)

    x = x_ref[...].astype(jnp.float32)
    if use_ln:
        mu = jnp.mean(x, axis=-1, keepdims=True)
        xc = x - mu
        var = jnp.mean(xc * xc, axis=-1, keepdims=True)
        x = xc * jax.lax.rsqrt(var + 1e-5) * ln_g_ref[...] + ln_b_ref[...]
    if quant_act:
        d = s_ref[0, 0]
        z = s_ref[0, 1]
        x = (jnp.clip(jnp.round(x / d) + z, 0.0, QMAX) - z) * d

    y = jnp.dot(x.astype(jnp.bfloat16), w_ref[...].astype(jnp.bfloat16),
                preferred_element_type=jnp.float32)
    y = y + b_ref[...]
    if act == "silu":
        y = y * (1.0 / (1.0 + jnp.exp(-y)))
    elif act == "gelu":
        c = math.sqrt(2.0 / math.pi)
        y = 0.5 * y * (1.0 + jnp.tanh(c * (y + 0.044715 * (y * y * y))))
    if add_res:
        y = y + res_ref[...].astype(jnp.float32)
    o_ref[...] = y.astype(o_ref.dtype)


def qlinear(x, w, b=None, *, scal=None, act="none", ln=None, res=None,
            out_dtype=jnp.bfloat16):
    shp = x.shape
    x2 = x.reshape(-1, shp[-1])
    M, K = x2.shape
    N = w.shape[1]
    quant_act = scal is not None
    use_ln = ln is not None
    add_res = res is not None

    b2 = (jnp.zeros((1, N), jnp.float32) if b is None
          else b.reshape(1, N).astype(jnp.float32))
    s = scal if quant_act else _NO_QUANT
    args = [x2, w, b2, s]
    if use_ln:
        g, be = ln
        args += [g.reshape(1, K).astype(jnp.float32),
                 be.reshape(1, K).astype(jnp.float32)]
    if add_res:
        args.append(res.reshape(M, N))

    kernel = functools.partial(_linear_kernel, act=act, quant_act=quant_act,
                               use_ln=use_ln, add_res=add_res)

    if M >= 256 and M % 2 == 0 and (M // 2) % 8 == 0:
        # 2-way row split: both v7x TensorCores get work; only 2 grid steps so
        # per-step overhead is negligible on single-TC v5e/v6e.
        # TODO(synk): N-tiling + vmem_limit_bytes for real UNet-sized layers.
        tm = M // 2
        in_specs = [pl.BlockSpec((tm, K), lambda i: (i, 0)),
                    pl.BlockSpec((K, N), lambda i: (0, 0)),
                    pl.BlockSpec((1, N), lambda i: (0, 0)),
                    pl.BlockSpec((1, 2), lambda i: (0, 0),
                                 memory_space=pltpu.MemorySpace.SMEM)]
        if use_ln:
            in_specs += [pl.BlockSpec((1, K), lambda i: (0, 0)),
                         pl.BlockSpec((1, K), lambda i: (0, 0))]
        if add_res:
            in_specs.append(pl.BlockSpec((tm, N), lambda i: (i, 0)))
        y = pl.pallas_call(
            kernel,
            out_shape=jax.ShapeDtypeStruct((M, N), out_dtype),
            grid=(2,),
            in_specs=in_specs,
            out_specs=pl.BlockSpec((tm, N), lambda i: (i, 0)),
            compiler_params=pltpu.CompilerParams(
                dimension_semantics=("parallel",)),
        )(*args)
    else:
        # Small M: single full-extent block (no grid, no padding, no slicing).
        n_in = len(args)
        in_specs = [pl.BlockSpec(memory_space=pltpu.MemorySpace.VMEM)] * n_in
        in_specs[3] = pl.BlockSpec(memory_space=pltpu.MemorySpace.SMEM)
        y = pl.pallas_call(
            kernel,
            out_shape=jax.ShapeDtypeStruct((M, N), out_dtype),
            in_specs=in_specs,
            out_specs=pl.BlockSpec(memory_space=pltpu.MemorySpace.VMEM),
        )(*args)
    return y.reshape(shp[:-1] + (N,))


# ----------------------------------------------------------------------------
# Pallas kernel 2: 3x3 conv with in-kernel im2col (9 shifted reads + 9
#                  accumulating bf16 dots), fused act fake-quant, bias,
#                  optional time-embedding add and residual add.
# ----------------------------------------------------------------------------
def _conv3x3_kernel(*refs, add_temb, add_res, H, W, Cin, Cout):
    it = iter(refs)
    x_ref = next(it)        # (1, H+2, W+2, Cin)  padded activation (bf16)
    w_ref = next(it)        # (9, Cin, Cout)       bf16 weights
    b_ref = next(it)        # (1, Cout)            f32 bias
    s_ref = next(it)        # (1, 2)               SMEM delta / zero_point
    temb_ref = next(it) if add_temb else None
    res_ref = next(it) if add_res else None
    o_ref = next(it)        # (1, H*W, Cout)

    d = s_ref[0, 0]
    z = s_ref[0, 1]
    acc = jnp.zeros((H * W, Cout), jnp.float32)
    for dh in range(3):
        for dw in range(3):
            patch = x_ref[0, dh:dh + H, dw:dw + W, :].astype(jnp.float32)
            # act fake-quant (padding zeros dequantize to exactly zero)
            patch = (jnp.clip(jnp.round(patch / d) + z, 0.0, QMAX) - z) * d
            patch2 = patch.reshape(H * W, Cin).astype(jnp.bfloat16)
            acc = acc + jnp.dot(patch2, w_ref[dh * 3 + dw].astype(jnp.bfloat16),
                                preferred_element_type=jnp.float32)
    y = acc + b_ref[...]
    if add_temb:
        y = y + temb_ref[...]
    if add_res:
        y = y + res_ref[0].astype(jnp.float32)
    o_ref[0] = y.astype(o_ref.dtype)


def qconv3x3(x_nhwc, w9, b, scal, *, temb=None, res=None, out_dtype=jnp.bfloat16):
    B, H, W, Cin = x_nhwc.shape
    Cout = w9.shape[2]
    # TODO(synk): fuse this pad (and the preceding group_norm+SiLU) into the
    # kernel prologue; it is the only remaining per-conv XLA pass.
    xp = jnp.pad(x_nhwc.astype(jnp.bfloat16), ((0, 0), (1, 1), (1, 1), (0, 0)))

    add_temb = temb is not None
    add_res = res is not None
    args = [xp, w9, b.reshape(1, Cout).astype(jnp.float32), scal]
    in_specs = [
        pl.BlockSpec((1, H + 2, W + 2, Cin), lambda bb: (bb, 0, 0, 0)),
        pl.BlockSpec((9, Cin, Cout), lambda bb: (0, 0, 0)),
        pl.BlockSpec((1, Cout), lambda bb: (0, 0)),
        pl.BlockSpec((1, 2), lambda bb: (0, 0),
                     memory_space=pltpu.MemorySpace.SMEM),
    ]
    if add_temb:
        args.append(temb.astype(jnp.float32))
        in_specs.append(pl.BlockSpec((1, Cout), lambda bb: (bb, 0)))
    if add_res:
        args.append(res.reshape(B, H * W, Cout))
        in_specs.append(pl.BlockSpec((1, H * W, Cout), lambda bb: (bb, 0, 0)))

    kernel = functools.partial(_conv3x3_kernel, add_temb=add_temb,
                               add_res=add_res, H=H, W=W, Cin=Cin, Cout=Cout)
    out = pl.pallas_call(
        kernel,
        out_shape=jax.ShapeDtypeStruct((B, H * W, Cout), out_dtype),
        grid=(B,),
        in_specs=in_specs,
        out_specs=pl.BlockSpec((1, H * W, Cout), lambda bb: (bb, 0, 0)),
        compiler_params=pltpu.CompilerParams(dimension_semantics=("parallel",)),
    )(*args)
    return out.reshape(B, H, W, Cout)


# ----------------------------------------------------------------------------
# Pallas kernel 3: attention, q-row tiled, with fused static q/k/v fake-quant,
#                  softmax (approx reciprocal), output projection, bias and
#                  residual add.  q/k/v are column-sliced from fused tensors.
# ----------------------------------------------------------------------------
def _attn_kernel(q_ref, kv_ref, res_ref, s_ref, wo_ref, bo_ref, o_ref, *,
                 scale, k_off, v_off, head_dim):
    Ch = head_dim

    def fq(x, d, z, post):
        xq = jnp.clip(jnp.round(x / d) + z, 0.0, QMAX)
        return (xq - z) * (d * post)

    # softmax scale folded into the q dequant multiplier
    q = fq(q_ref[0, :, 0:Ch].astype(jnp.float32), s_ref[0, 0], s_ref[0, 1], scale)
    k = fq(kv_ref[0, :, k_off:k_off + Ch].astype(jnp.float32),
           s_ref[1, 0], s_ref[1, 1], 1.0)
    v = fq(kv_ref[0, :, v_off:v_off + Ch].astype(jnp.float32),
           s_ref[2, 0], s_ref[2, 1], 1.0)

    sc = jax.lax.dot_general(q.astype(jnp.bfloat16), k.astype(jnp.bfloat16),
                             (((1,), (1,)), ((), ())),
                             preferred_element_type=jnp.float32)
    sc = sc - jnp.max(sc, axis=-1, keepdims=True)
    probs = jnp.exp(sc)
    probs = probs * pl.reciprocal(jnp.sum(probs, axis=-1, keepdims=True),
                                  approx=True)
    a = jnp.dot(probs.astype(jnp.bfloat16), v.astype(jnp.bfloat16),
                preferred_element_type=jnp.float32)
    # to_out input activation quant (static calibrated scale)
    a = fq(a, s_ref[3, 0], s_ref[3, 1], 1.0)
    y = jnp.dot(a.astype(jnp.bfloat16), wo_ref[...].astype(jnp.bfloat16),
                preferred_element_type=jnp.float32)
    y = y + bo_ref[...] + res_ref[0].astype(jnp.float32)
    o_ref[0] = y.astype(o_ref.dtype)


def pallas_attention(q_src, kv_src, residual, scales, wo, bo, *, k_off, v_off,
                     out_dtype=jnp.bfloat16):
    B, Sq, Wq = q_src.shape
    Sk, Wkv = kv_src.shape[1], kv_src.shape[2]
    Ch = wo.shape[0]
    scale = 1.0 / math.sqrt(Ch)
    tq = 64 if Sq % 64 == 0 else Sq
    bo2 = bo.reshape(1, Ch).astype(jnp.float32)
    kernel = functools.partial(_attn_kernel, scale=scale, k_off=k_off,
                               v_off=v_off, head_dim=Ch)
    return pl.pallas_call(
        kernel,
        out_shape=jax.ShapeDtypeStruct((B, Sq, Ch), out_dtype),
        grid=(B, Sq // tq),
        in_specs=[
            pl.BlockSpec((1, tq, Wq), lambda b, i: (b, i, 0)),
            pl.BlockSpec((1, Sk, Wkv), lambda b, i: (b, 0, 0)),
            pl.BlockSpec((1, tq, Ch), lambda b, i: (b, i, 0)),
            pl.BlockSpec((4, 2), lambda b, i: (0, 0),
                         memory_space=pltpu.MemorySpace.SMEM),
            pl.BlockSpec((Ch, Ch), lambda b, i: (0, 0)),
            pl.BlockSpec((1, Ch), lambda b, i: (0, 0)),
        ],
        out_specs=pl.BlockSpec((1, tq, Ch), lambda b, i: (b, i, 0)),
        compiler_params=pltpu.CompilerParams(
            dimension_semantics=("parallel", "parallel")),
    )(q_src, kv_src, residual, scales, wo, bo2)


# ----------------------------------------------------------------------------
# small glue kept in XLA (norms / SiLU / sinusoidal embedding / M=2 matmuls)
# ----------------------------------------------------------------------------
def group_norm(x, gamma, beta, groups=8, eps=1e-5):
    # TODO(synk): fuse group_norm + SiLU into the conv kernel prologue.
    x = x.astype(jnp.float32)
    B, H, W, Cc = x.shape
    xg = x.reshape(B, H, W, groups, Cc // groups)
    mean = xg.mean(axis=(1, 2, 4), keepdims=True)
    var = xg.var(axis=(1, 2, 4), keepdims=True)
    xn = ((xg - mean) / jnp.sqrt(var + eps)).reshape(B, H, W, Cc)
    return xn * gamma + beta


def layer_norm(x, gamma, beta, eps=1e-5):
    mu = x.mean(-1, keepdims=True)
    var = x.var(-1, keepdims=True)
    return (x - mu) / jnp.sqrt(var + eps) * gamma + beta


def silu(x):
    return x * jax.nn.sigmoid(x)


def gelu_tanh(x):
    c = math.sqrt(2.0 / math.pi)
    return 0.5 * x * (1.0 + jnp.tanh(c * (x + 0.044715 * x * x * x)))


def timestep_embedding(t, dim):
    half = dim // 2
    freqs = jnp.exp(-math.log(10000.0) * jnp.arange(half, dtype=jnp.float32) / half)
    args = t.astype(jnp.float32)[:, None] * freqs[None, :]
    return jnp.concatenate([jnp.sin(args), jnp.cos(args)], axis=-1)


# ----------------------------------------------------------------------------
# calibration: one pure-JAX pass that records static per-tensor act-quant
# params (delta, zero_point) at every QuantLayer / aqtizer site, like the real
# QuantModel's calibration (cali=True).
# ----------------------------------------------------------------------------
def _calib_forward(p, sample, timesteps, ehs):
    s = {}
    x = jnp.transpose(sample, (0, 2, 3, 1))
    s["conv_in"] = _dz_array(x)

    t_emb = timestep_embedding(timesteps, T_PROJ)
    s["te1"] = _dz_array(t_emb)
    e1 = silu(t_emb @ p["te_w1"] + p["te_b1"])
    s["te2"] = _dz_array(e1)
    emb = e1 @ p["te_w2"] + p["te_b2"]

    def conv_ref(xx, w, b):
        return jax.lax.conv_general_dilated(
            xx, w, (1, 1), "SAME",
            dimension_numbers=("NHWC", "HWIO", "NHWC")) + b

    h = conv_ref(x, p["conv_in_w"], p["conv_in_b"])
    res = h
    a = silu(group_norm(h, p["rn_gn1_g"], p["rn_gn1_b"]))
    s["rn_conv1"] = _dz_array(a)
    h = conv_ref(a, p["rn_conv1_w"], p["rn_conv1_b"])
    se = silu(emb)
    s["rn_temb"] = _dz_array(se)
    temb = se @ p["rn_temb_w"] + p["rn_temb_b"]
    h = h + temb[:, None, None, :]
    a = silu(group_norm(h, p["rn_gn2_g"], p["rn_gn2_b"]))
    s["rn_conv2"] = _dz_array(a)
    h = conv_ref(a, p["rn_conv2_w"], p["rn_conv2_b"]) + res

    B, H, W, Ch = h.shape
    tok = h.reshape(B, H * W, Ch)

    def sdpa(qq, kk, vv):
        scs = jnp.einsum("bqd,bkd->bqk", qq, kk) / math.sqrt(qq.shape[-1])
        pr = jax.nn.softmax(scs, axis=-1)
        return jnp.einsum("bqk,bkd->bqd", pr, vv)

    n = layer_norm(tok, p["ln1_g"], p["ln1_b"])
    q1 = n @ p["a1_wq"]
    k1 = n @ p["a1_wk"]
    v1 = n @ p["a1_wv"]
    at1 = sdpa(q1, k1, v1)
    s["a1"] = jnp.concatenate([_dz_array(q1), _dz_array(k1), _dz_array(v1),
                               _dz_array(at1)], axis=0)
    tok = tok + at1 @ p["a1_wo"] + p["a1_bo"]

    n = layer_norm(tok, p["ln2_g"], p["ln2_b"])
    q2 = n @ p["a2_wq"]
    k2 = ehs @ p["a2_wk"]
    v2 = ehs @ p["a2_wv"]
    at2 = sdpa(q2, k2, v2)
    s["a2"] = jnp.concatenate([_dz_array(q2), _dz_array(k2), _dz_array(v2),
                               _dz_array(at2)], axis=0)
    tok = tok + at2 @ p["a2_wo"] + p["a2_bo"]

    n = layer_norm(tok, p["ln3_g"], p["ln3_b"])
    s["ff1"] = _dz_array(n)
    f = gelu_tanh(n @ p["ff_w1"] + p["ff_b1"])
    s["ff2"] = _dz_array(f)
    tok = tok + f @ p["ff_w2"] + p["ff_b2"]

    h = tok.reshape(B, H, W, Ch)
    a = silu(group_norm(h, p["out_gn_g"], p["out_gn_b"]))
    s["conv_out"] = _dz_array(a)
    return s


# ----------------------------------------------------------------------------
# parameter init (weight fake-quant + calibration + kernel-layout packing)
# ----------------------------------------------------------------------------
def init_params(key, sample, timesteps, ehs):
    def nrm(k, shape, scale=0.05):
        return scale * jax.random.normal(k, shape, dtype=jnp.float32)

    ks = iter(jax.random.split(key, 32))
    raw = {
        "conv_in_w": nrm(next(ks), (3, 3, IN_CH, C)),
        "conv_in_b": jnp.zeros((C,), jnp.float32),
        "te_w1": nrm(next(ks), (T_PROJ, T_EMB)),
        "te_b1": jnp.zeros((T_EMB,), jnp.float32),
        "te_w2": nrm(next(ks), (T_EMB, T_EMB)),
        "te_b2": jnp.zeros((T_EMB,), jnp.float32),
        "rn_gn1_g": jnp.ones((C,), jnp.float32), "rn_gn1_b": jnp.zeros((C,), jnp.float32),
        "rn_conv1_w": nrm(next(ks), (3, 3, C, C)), "rn_conv1_b": jnp.zeros((C,), jnp.float32),
        "rn_temb_w": nrm(next(ks), (T_EMB, C)), "rn_temb_b": jnp.zeros((C,), jnp.float32),
        "rn_gn2_g": jnp.ones((C,), jnp.float32), "rn_gn2_b": jnp.zeros((C,), jnp.float32),
        "rn_conv2_w": nrm(next(ks), (3, 3, C, C)), "rn_conv2_b": jnp.zeros((C,), jnp.float32),
        "ln1_g": jnp.ones((C,), jnp.float32), "ln1_b": jnp.zeros((C,), jnp.float32),
        "a1_wq": nrm(next(ks), (C, C)), "a1_wk": nrm(next(ks), (C, C)),
        "a1_wv": nrm(next(ks), (C, C)),
        "a1_wo": nrm(next(ks), (C, C)), "a1_bo": jnp.zeros((C,), jnp.float32),
        "ln2_g": jnp.ones((C,), jnp.float32), "ln2_b": jnp.zeros((C,), jnp.float32),
        "a2_wq": nrm(next(ks), (C, C)), "a2_wk": nrm(next(ks), (X_DIM, C)),
        "a2_wv": nrm(next(ks), (X_DIM, C)),
        "a2_wo": nrm(next(ks), (C, C)), "a2_bo": jnp.zeros((C,), jnp.float32),
        "ln3_g": jnp.ones((C,), jnp.float32), "ln3_b": jnp.zeros((C,), jnp.float32),
        "ff_w1": nrm(next(ks), (C, 4 * C)), "ff_b1": jnp.zeros((4 * C,), jnp.float32),
        "ff_w2": nrm(next(ks), (4 * C, C)), "ff_b2": jnp.zeros((C,), jnp.float32),
        "out_gn_g": jnp.ones((C,), jnp.float32), "out_gn_b": jnp.zeros((C,), jnp.float32),
        "conv_out_w": nrm(next(ks), (3, 3, C, IN_CH)),
        "conv_out_b": jnp.zeros((IN_CH,), jnp.float32),
    }

    # weight fake-quantization (QuantLayer use_wq=True), once at init
    wq_names = ["conv_in_w", "rn_conv1_w", "rn_conv2_w", "conv_out_w",
                "te_w1", "te_w2", "rn_temb_w",
                "a1_wq", "a1_wk", "a1_wv", "a1_wo",
                "a2_wq", "a2_wk", "a2_wv", "a2_wo",
                "ff_w1", "ff_w2"]
    for n in wq_names:
        raw[n] = fake_quant_weight(raw[n])

    # activation calibration (static delta / zero_point, like real QuantLayer)
    aq = jax.jit(_calib_forward)(raw, sample, timesteps, ehs)

    bf = jnp.bfloat16
    p = {}
    # time-embedding path stays in XLA (M=2 matmuls)
    for n in ["te_w1", "te_b1", "te_w2", "te_b2", "rn_temb_w", "rn_temb_b"]:
        p[n] = raw[n]
    # norm affine params
    for n in ["rn_gn1_g", "rn_gn1_b", "rn_gn2_g", "rn_gn2_b",
              "out_gn_g", "out_gn_b",
              "ln1_g", "ln1_b", "ln2_g", "ln2_b", "ln3_g", "ln3_b"]:
        p[n] = raw[n]
    # conv weights: (3,3,ci,co) -> (9,ci,co) bf16 for in-kernel im2col dots
    for n in ["conv_in", "rn_conv1", "rn_conv2", "conv_out"]:
        w = raw[n + "_w"]
        p[n + "_w9"] = w.reshape(9, w.shape[2], w.shape[3]).astype(bf)
        p[n + "_b"] = raw[n + "_b"]
    # transformer weights (bf16, fused where useful)
    p["a1_wqkv"] = jnp.concatenate([raw["a1_wq"], raw["a1_wk"], raw["a1_wv"]],
                                   axis=1).astype(bf)                     # (C, 3C)
    p["a1_wo"] = raw["a1_wo"].astype(bf)
    p["a1_bo"] = raw["a1_bo"]
    p["a2_wq"] = raw["a2_wq"].astype(bf)
    p["a2_wkv"] = jnp.concatenate([raw["a2_wk"], raw["a2_wv"]], axis=1).astype(bf)
    p["a2_wo"] = raw["a2_wo"].astype(bf)
    p["a2_bo"] = raw["a2_bo"]
    p["ff_w1"] = raw["ff_w1"].astype(bf)
    p["ff_b1"] = raw["ff_b1"]
    p["ff_w2"] = raw["ff_w2"].astype(bf)
    p["ff_b2"] = raw["ff_b2"]
    # calibrated static activation-quant params
    for k_, v_ in aq.items():
        p["aq_" + k_] = v_
    return p


# ----------------------------------------------------------------------------
# QuantModel.forward(sample, timesteps, encoder_hidden_states)
# ----------------------------------------------------------------------------
def quant_model_forward(p, sample, timesteps, encoder_hidden_states):
    # NCHW -> NHWC (channels on the 128-lane axis)
    x = jnp.transpose(sample, (0, 2, 3, 1))

    # time_proj + time_embedding + time_emb_proj: M=2 matmuls stay in XLA
    # (pallas_call launch overhead > the math); static calibrated act-quant.
    t_emb = timestep_embedding(timesteps, T_PROJ)
    e1 = silu(_fq_jnp(t_emb, p["aq_te1"]) @ p["te_w1"] + p["te_b1"])
    emb = _fq_jnp(e1, p["aq_te2"]) @ p["te_w2"] + p["te_b2"]
    se = silu(emb)
    temb = _fq_jnp(se, p["aq_rn_temb"]) @ p["rn_temb_w"] + p["rn_temb_b"]   # (B, C)

    # conv_in
    h = qconv3x3(x, p["conv_in_w9"], p["conv_in_b"], p["aq_conv_in"])

    # --- QuantResnetBlock2D ---
    res = h
    a = silu(group_norm(h, p["rn_gn1_g"], p["rn_gn1_b"]))
    h = qconv3x3(a, p["rn_conv1_w9"], p["rn_conv1_b"], p["aq_rn_conv1"], temb=temb)
    a = silu(group_norm(h, p["rn_gn2_g"], p["rn_gn2_b"]))
    h = qconv3x3(a, p["rn_conv2_w9"], p["rn_conv2_b"], p["aq_rn_conv2"], res=res)

    # --- QuantBasicTransformerBlock ---
    B_, H_, W_, Ch = h.shape
    tok = h.reshape(B_, H_ * W_, Ch)

    # attn1 (self): fused LN+QKV projection; attention kernel does static
    # q/k/v fake-quant, softmax, out projection, bias and residual add.
    qkv = qlinear(tok, p["a1_wqkv"], ln=(p["ln1_g"], p["ln1_b"]))        # (B,HW,3C)
    tok = pallas_attention(qkv, qkv, tok, p["aq_a1"], p["a1_wo"], p["a1_bo"],
                           k_off=Ch, v_off=2 * Ch)

    # attn2 (cross): fused LN+Q projection, fused KV projection
    q = qlinear(tok, p["a2_wq"], ln=(p["ln2_g"], p["ln2_b"]))            # (B,HW,C)
    kv = qlinear(encoder_hidden_states, p["a2_wkv"])                     # (B,SEQ,2C)
    tok = pallas_attention(q, kv, tok, p["aq_a2"], p["a2_wo"], p["a2_bo"],
                           k_off=0, v_off=Ch)

    # feed-forward: LN + act-quant + GELU fused into matmul 1; act-quant +
    # residual add fused into matmul 2.
    f = qlinear(tok, p["ff_w1"], p["ff_b1"], scal=p["aq_ff1"],
                ln=(p["ln3_g"], p["ln3_b"]), act="gelu")
    tok = qlinear(f, p["ff_w2"], p["ff_b2"], scal=p["aq_ff2"], res=tok)

    h = tok.reshape(B_, H_, W_, Ch)

    # conv_out
    a = silu(group_norm(h, p["out_gn_g"], p["out_gn_b"]))
    out = qconv3x3(a, p["conv_out_w9"], p["conv_out_b"], p["aq_conv_out"],
                   out_dtype=jnp.float32)

    # NHWC -> NCHW to match PyTorch output convention
    return jnp.transpose(out, (0, 3, 1, 2))


if __name__ == "__main__":
    key = jax.random.PRNGKey(0)
    kp, ksamp, kenc = jax.random.split(key, 3)

    Bn = 2
    sample = jax.random.normal(ksamp, (Bn, IN_CH, SAMPLE, SAMPLE), dtype=jnp.float32)
    timesteps = jnp.array([10.0, 500.0], dtype=jnp.float32)
    encoder_hidden_states = jax.random.normal(kenc, (Bn, SEQ, X_DIM), dtype=jnp.float32)

    # init includes weight fake-quant and static activation calibration
    params = init_params(kp, sample, timesteps, encoder_hidden_states)

    fwd = jax.jit(quant_model_forward)
    out = fwd(params, sample, timesteps, encoder_hidden_states)
    jax.block_until_ready(out)
    assert out.shape == (Bn, IN_CH, SAMPLE, SAMPLE)
    print("KERNEL_OK")
</pallas_src>

<mosaic_0001>
module {
  func.func @main(%arg0: i32, %arg1: i32, %arg2: i32, %arg3: memref<1x256x256xf32, #tpu.memory_space<vmem>>, %arg4: memref<1x256x32xf32, #tpu.memory_space<vmem>>, %arg5: memref<1x256x32xf32, #tpu.memory_space<vmem>>, %arg6: memref<1x256x1xf32, #tpu.memory_space<vmem>>, %arg7: memref<1x256x1xf32, #tpu.memory_space<vmem>>) attributes {dimension_semantics = [#tpu.dimension_semantics<parallel>, #tpu.dimension_semantics<parallel>, #tpu.dimension_semantics<arbitrary>], iteration_bounds = array<i64: 2, 1, 1>, scratch_operands = 2 : i64, window_params = [{transform_indices = @qk_fn, window_bounds = array<i64: 1, 256, 256>}, {transform_indices = @v_fn, window_bounds = array<i64: 1, 256, 32>}, {transform_indices = @oi_fn, window_bounds = array<i64: 1, 256, 32>}]} {
    %c0 = arith.constant 0 : index
    %c0_i32 = arith.constant 0 : i32
    %0 = arith.cmpi eq, %c0_i32, %arg2 : i32
    scf.if %0 {
      %cst_3 = arith.constant dense<0.000000e+00> : vector<1x256x32xf32>
      vector.store %cst_3, %arg5[%c0, %c0, %c0] : memref<1x256x32xf32, #tpu.memory_space<vmem>>, vector<1x256x32xf32>
      %cst_4 = arith.constant dense<0xFF800000> : vector<1x256x1xf32>
      vector.store %cst_4, %arg6[%c0, %c0, %c0] : memref<1x256x1xf32, #tpu.memory_space<vmem>>, vector<1x256x1xf32>
      %cst_5 = arith.constant dense<0.000000e+00> : vector<1x256x1xf32>
      vector.store %cst_5, %arg7[%c0, %c0, %c0] : memref<1x256x1xf32, #tpu.memory_space<vmem>>, vector<1x256x1xf32>
    }
    %1 = vector.load %arg3[%c0, %c0, %c0] : memref<1x256x256xf32, #tpu.memory_space<vmem>>, vector<1x256x256xf32>
    %cst = arith.constant dense<0xFF800000> : vector<1x256xf32>
    %2 = vector.multi_reduction <maximumf>, %1, %cst [2] : vector<1x256x256xf32> to vector<1x256xf32>
    %3 = vector.shape_cast %2 : vector<1x256xf32> to vector<1x256x1xf32>
    %4 = vector.load %arg6[%c0, %c0, %c0] : memref<1x256x1xf32, #tpu.memory_space<vmem>>, vector<1x256x1xf32>
    %5 = arith.maximumf %4, %3 : vector<1x256x1xf32>
    %cst_0 = arith.constant dense<0.000000e+00> : vector<1x256x1xf32>
    %6 = arith.cmpf oeq, %4, %5 : vector<1x256x1xf32>
    %7 = arith.subf %4, %5 : vector<1x256x1xf32>
    %8 = arith.select %6, %cst_0, %7 : vector<1x256x1xi1>, vector<1x256x1xf32>
    %9 = vector.broadcast %5 : vector<1x256x1xf32> to vector<1x256x256xf32>
    %10 = arith.subf %1, %9 : vector<1x256x256xf32>
    %11 = math.exp %10 : vector<1x256x256xf32>
    %cst_1 = arith.constant dense<0.000000e+00> : vector<1x256xf32>
    %12 = vector.multi_reduction <add>, %11, %cst_1 [2] : vector<1x256x256xf32> to vector<1x256xf32>
    %13 = vector.shape_cast %12 : vector<1x256xf32> to vector<1x256x1xf32>
    %14 = vector.load %arg7[%c0, %c0, %c0] : memref<1x256x1xf32, #tpu.memory_space<vmem>>, vector<1x256x1xf32>
    %15 = math.exp %8 : vector<1x256x1xf32>
    %16 = arith.mulf %15, %14 : vector<1x256x1xf32>
    %17 = arith.addf %16, %13 : vector<1x256x1xf32>
    %18 = vector.load %arg5[%c0, %c0, %c0] : memref<1x256x32xf32, #tpu.memory_space<vmem>>, vector<1x256x32xf32>
    %19 = math.exp %8 : vector<1x256x1xf32>
    %20 = arith.mulf %19, %14 : vector<1x256x1xf32>
    %21 = vector.broadcast %20 : vector<1x256x1xf32> to vector<1x256x32xf32>
    %22 = arith.mulf %21, %18 : vector<1x256x32xf32>
    %23 = vector.load %arg4[%c0, %c0, %c0] : memref<1x256x32xf32, #tpu.memory_space<vmem>>, vector<1x256x32xf32>
    %24 = vector.shape_cast %23 : vector<1x256x32xf32> to vector<256x32xf32>
    %25 = vector.shape_cast %11 : vector<1x256x256xf32> to vector<256x256xf32>
    %26 = vector.shape_cast %22 : vector<1x256x32xf32> to vector<256x32xf32>
    %27 = tpu.matmul %25, %24, %26 {dimension_numbers = #tpu.dot_dimension_numbers<[1], [0], [0], [1], [0, 0, 1, 1], [], []>, precision = #tpu.contract_precision<bf16>} : vector<256x256xf32>, vector<256x32xf32>, vector<256x32xf32> -> vector<256x32xf32>
    %28 = vector.shape_cast %27 : vector<256x32xf32> to vector<1x256x32xf32>
    %cst_2 = arith.constant dense<1.000000e+00> : vector<1x256x1xf32>
    %29 = arith.divf %cst_2, %17 : vector<1x256x1xf32>
    %30 = vector.broadcast %29 : vector<1x256x1xf32> to vector<1x256x32xf32>
    %31 = arith.mulf %28, %30 : vector<1x256x32xf32>
    %32 = vector.shape_cast %31 : vector<1x256x32xf32> to vector<1x256x32xf32>
    vector.store %32, %arg5[%c0, %c0, %c0] : memref<1x256x32xf32, #tpu.memory_space<vmem>>, vector<1x256x32xf32>
    vector.store %5, %arg6[%c0, %c0, %c0] : memref<1x256x1xf32, #tpu.memory_space<vmem>>, vector<1x256x1xf32>
    vector.store %17, %arg7[%c0, %c0, %c0] : memref<1x256x1xf32, #tpu.memory_space<vmem>>, vector<1x256x1xf32>
    return
  }
  func.func @qk_fn(%arg0: i32, %arg1: i32, %arg2: i32) -> (i32, i32, i32) {
    return %arg0, %arg1, %arg2 : i32, i32, i32
  }
  func.func @v_fn(%arg0: i32, %arg1: i32, %arg2: i32) -> (i32, i32, i32) {
    %c0_i32 = arith.constant 0 : i32
    return %arg0, %arg2, %c0_i32 : i32, i32, i32
  }
  func.func @oi_fn(%arg0: i32, %arg1: i32, %arg2: i32) -> (i32, i32, i32) {
    %c0_i32 = arith.constant 0 : i32
    return %arg0, %arg1, %c0_i32 : i32, i32, i32
  }
}

</mosaic_0001>

<llo_original>
// kernel: online-softmax
$region0: #{online-softmax}
  #allocation0 [shape = 'u32[]', space=smem, size = 0x4, offset = 0x4, fixed_abs, tag = 'smem constant byte address 0x4 - core index']
  #allocation1 [shape = 'u32[144,128]{1,0:T(1,128)}', space=vmem, size = 0x12000, scoped, tag = 'internal scratch']
  #allocation2 [shape = 'f32[1,256,1]{2,1,0:T(8,128)}', space=vmem, size = 0x20000, scoped, tag = 'scratch operand']
  #allocation3 [shape = 'f32[1,256,1]{2,1,0:T(8,128)}', space=vmem, size = 0x20000, scoped, tag = 'scratch operand']
  %s0 = inlined_call_operand.vmem [shape: f32[2,256,256], index: 0, kind: input, shape index: {}]
  %s1 = inlined_call_operand.vmem [shape: f32[2,256,32], index: 1, kind: input, shape index: {}]
  %s2 = inlined_call_operand.vmem [shape: f32[2,256,32], index: 2, kind: output, shape index: {}]
  %s3 = sld [smem:[#allocation0]]
  $region45: #{online-softmax} parent=0
    _
  %s5 = ssub.s32 1, %s3
  %s6 = scalar_select 0, %s5, %s3
  loop: start=0, step=1, limit=4
  $region2: #{online-softmax} parent=0 // loop_pre_header
    _
  $region3: #{online-softmax} parent=0 // loop_header
    %s8 = sphi 0, %s12
    %p9 = scmp.ge.s32.totalorder %s8, 4
    %s15 = sphi 0, %s34
    %s16 = sphi 0, %s30
    %s17 = sphi 0, %s26
    %s18 = sphi 0, %s15
    %s19 = sphi 0, %s16
    %s20 = sphi 0, %s17
    %s21 = sphi 0, %s18
    %s22 = sphi 0, %s19
    %s23 = sphi 0, %s20
    %s41 = sphi 0, %s43
    %s44 = sphi 0, %s41
    %s45 = sphi 0, %s44
    %s61 = sphi 0, %s45
    %s69 = sphi 0, %s71
    %s72 = sphi 0, %s69
    %s73 = sphi 0, %s72
    %s89 = sphi 0, %s73
    %s97 = sphi 0, %s99
    %s100 = sphi 0, %s97
    %s101 = sphi 0, %s100
    %s117 = sphi 0, %s101
  $region4: #{online-softmax} parent=0 // loop_header_branch
    %11 = sbr.rel (%p9) target = $region8
  $region5: #{online-softmax} parent=0 // loop_body
    %s13 = ssub.s32 %s8, 1
    %s14 = ssub.s32 %s8, 2
    %s24 = sadd.s32 1, %s17
    %p25 = scmp.ge.s32.totalorder %s24, 1
    %s26 = scalar_select %p25, 0, %s24
    %s27 = sadd.s32 1, %s16
    %s28 = scalar_select %p25, %s27, %s16
    %p29 = scmp.ge.s32.totalorder %s28, 1
    %s30 = scalar_select %p29, 0, %s28
    %s31 = sadd.s32 1, %s15
    %s32 = scalar_select %p29, %s31, %s15
    %p33 = scmp.ge.s32.totalorder %s32, 2
    %s34 = scalar_select %p33, 0, %s32
    %s35 = ssub.s32 %s15, %s34
    %s36 = ssub.s32 %s16, %s30
    %s37 = sor.u32 %s35, %s36
    %s38 = ssub.s32 %s17, %s26
    %s39 = sor.u32 %s37, %s38
    %p40 = scmp.eq.s32.totalorder %s39, 0
    %s42 = sadd.s32 %s41, 1
    %s43 = scalar_select %p40, %s41, %s42
    %p46 = pneg %p40
    %p47 = scmp.eq.s32.totalorder %s8, 1
    %p48 = por %p46, %p47
    %p49 = scmp.ne.s32.totalorder %s41, %s44
    %p50 = scmp.eq.s32.totalorder %s8, 0
    %p51 = por %p49, %p50
    %p52 = scmp.ne.s32.totalorder %s41, %s44
    %p53 = scmp.eq.s32.totalorder %s13, 1
    %p54 = por %p52, %p53
    %p55 = scmp.ne.s32.totalorder %s44, %s45
    %p56 = scmp.eq.s32.totalorder %s13, 0
    %p57 = por %p55, %p56
    %p58 = scmp.ne.s32.totalorder %s44, %s45
    %p59 = scmp.eq.s32.totalorder %s14, 1
    %p60 = por %p58, %p59
    %p62 = scmp.ne.s32.totalorder %s45, %s61
    %p63 = scmp.eq.s32.totalorder %s14, 0
    %p64 = por %p62, %p63
    %s65 = ssub.s32 %s15, %s34
    %s66 = ssub.s32 %s17, %s26
    %s67 = sor.u32 %s65, %s66
    %p68 = scmp.eq.s32.totalorder %s67, 0
    %s70 = sadd.s32 %s69, 1
    %s71 = scalar_select %p68, %s69, %s70
    %p74 = pneg %p68
    %p75 = scmp.eq.s32.totalorder %s8, 1
    %p76 = por %p74, %p75
    %p77 = scmp.ne.s32.totalorder %s69, %s72
    %p78 = scmp.eq.s32.totalorder %s8, 0
    %p79 = por %p77, %p78
    %p80 = scmp.ne.s32.totalorder %s69, %s72
    %p81 = scmp.eq.s32.totalorder %s13, 1
    %p82 = por %p80, %p81
    %p83 = scmp.ne.s32.totalorder %s72, %s73
    %p84 = scmp.eq.s32.totalorder %s13, 0
    %p85 = por %p83, %p84
    %p86 = scmp.ne.s32.totalorder %s72, %s73
    %p87 = scmp.eq.s32.totalorder %s14, 1
    %p88 = por %p86, %p87
    %p90 = scmp.ne.s32.totalorder %s73, %s89
    %p91 = scmp.eq.s32.totalorder %s14, 0
    %p92 = por %p90, %p91
    %s93 = ssub.s32 %s15, %s34
    %s94 = ssub.s32 %s16, %s30
    %s95 = sor.u32 %s93, %s94
    %p96 = scmp.eq.s32.totalorder %s95, 0
    %s98 = sadd.s32 %s97, 1
    %s99 = scalar_select %p96, %s97, %s98
    %p102 = pneg %p96
    %p103 = scmp.eq.s32.totalorder %s8, 1
    %p104 = por %p102, %p103
    %p105 = scmp.ne.s32.totalorder %s97, %s100
    %p106 = scmp.eq.s32.totalorder %s8, 0
    %p107 = por %p105, %p106
    %p108 = scmp.ne.s32.totalorder %s97, %s100
    %p109 = scmp.eq.s32.totalorder %s13, 1
    %p110 = por %p108, %p109
    %p111 = scmp.ne.s32.totalorder %s100, %s101
    %p112 = scmp.eq.s32.totalorder %s13, 0
    %p113 = por %p111, %p112
    %p114 = scmp.ne.s32.totalorder %s100, %s101
    %p115 = scmp.eq.s32.totalorder %s14, 1
    %p116 = por %p114, %p115
    %p118 = scmp.ne.s32.totalorder %s101, %s117
    %p119 = scmp.eq.s32.totalorder %s14, 0
    %p120 = por %p118, %p119
    %p121 = scmp.le.s32.totalorder 1, %s8
    %p122 = scmp.lt.s32.totalorder %s8, 3
    %p123 = pnand %p121, %p122
    %p124 = pneg %p123
    // Predicated region
    $region9: #{online-softmax} parent=5 // pred_check
      _
    $region10: #{online-softmax} parent=5 // pred_check_branch
      %126 = sbr.rel (%p123) target = $region12
    $region11: #{online-softmax} parent=5 // pred_region
      %s127 = ssub.s32 %s8, 1
    $region12: #{online-softmax} parent=5 // pred_fallthru
      _
    %p128 = scmp.lt.s32.totalorder %s8, 2
    // Predicated region
    $region13: #{online-softmax} parent=5 // pred_check
      %p129 = pneg %p128
    $region14: #{online-softmax} parent=5 // pred_check_branch
      %131 = sbr.rel (%p129) target = $region16
    $region15: #{online-softmax} parent=5 // pred_region
      // Predicated region
      $region17: #{online-softmax} parent=15 // pred_check
        %p132 = pneg %p51
      $region18: #{online-softmax} parent=15 // pred_check_branch
        %134 = sbr.rel (%p132) target = $region20
      $region19: #{online-softmax} parent=15 // pred_region
        %s135 = smul.u32 32, %s16
        %s136 = smul.u32 2, %s17
        %p137 = scmp.lt.s32.totalorder %s15, 1
        %s138 = scalar_select %p137, %s15, 1
        %p139 = scmp.lt.s32.totalorder %s135, 31
        %s140 = scalar_select %p139, %s135, 31
        %p141 = scmp.lt.s32.totalorder %s136, 1
        %s142 = scalar_select %p141, %s136, 1
        %s143 = smul.addr %s140, 2
        %s144 = sadd.s32 %s142, %s143
        %s145 = smul.addr %s138, 64
        %s146 = sadd.s32 %s144, %s145
        %s147 = smul.addr %s146, 8
        %s148 = scalar_lea.vmem %s0, %s147
        %s149 = smul.u32 32, %s16
        %s150 = smul.u32 2, %s17
      $region20: #{online-softmax} parent=15 // pred_fallthru
        _
      // Predicated region
      $region21: #{online-softmax} parent=15 // pred_check
        %p151 = pneg %p79
      $region22: #{online-softmax} parent=15 // pred_check_branch
        %153 = sbr.rel (%p151) target = $region24
      $region23: #{online-softmax} parent=15 // pred_region
        %s154 = smul.u32 32, %s17
        %p155 = scmp.lt.s32.totalorder %s15, 1
        %s156 = scalar_select %p155, %s15, 1
        %p157 = scmp.lt.s32.totalorder %s154, 31
        %s158 = scalar_select %p157, %s154, 31
        %s159 = smul.addr %s156, 32
        %s160 = sadd.s32 %s158, %s159
        %s161 = smul.addr %s160, 8
        %s162 = scalar_lea.vmem %s1, %s161
        %s163 = smul.u32 32, %s17
      $region24: #{online-softmax} parent=15 // pred_fallthru
        _
    $region16: #{online-softmax} parent=5 // pred_fallthru
      _
    %p164 = scmp.le.s32.totalorder 1, %s8
    %p165 = scmp.lt.s32.totalorder %s8, 3
    %p166 = pnand %p164, %p165
    %p167 = pneg %p166
    // Predicated region
    $region25: #{online-softmax} parent=5 // pred_check
      _
    $region26: #{online-softmax} parent=5 // pred_check_branch
      %169 = sbr.rel (%p166) target = $region28
    $region27: #{online-softmax} parent=5 // pred_region
      %s170 = ssub.s32 %s8, 1
      %s171 = smul.u32 32, %s19
      %s172 = smul.u32 2, %s20
      %p173 = scmp.lt.s32.totalorder %s18, 1
      %s174 = scalar_select %p173, %s18, 1
      %p175 = scmp.lt.s32.totalorder %s171, 31
      %s176 = scalar_select %p175, %s171, 31
      %p177 = scmp.lt.s32.totalorder %s172, 1
      %s178 = scalar_select %p177, %s172, 1
      %s179 = smul.addr %s176, 2
      %s180 = sadd.s32 %s178, %s179
      %s181 = smul.addr %s174, 64
      %s182 = sadd.s32 %s180, %s181
      %s183 = smul.addr %s182, 8
      %s184 = scalar_lea.vmem %s0, %s183
      %p185 = pneg %p57
      %p186 = pneg %p54
      %s187 = smul.u32 32, %s20
      %p188 = scmp.lt.s32.totalorder %s18, 1
      %s189 = scalar_select %p188, %s18, 1
      %p190 = scmp.lt.s32.totalorder %s187, 31
      %s191 = scalar_select %p190, %s187, 31
      %s192 = smul.addr %s189, 32
      %s193 = sadd.s32 %s191, %s192
      %s194 = smul.addr %s193, 8
      %s195 = scalar_lea.vmem %s1, %s194
      %p196 = pneg %p85
      %p197 = pneg %p82
      %p198 = pneg %p113
      %p199 = pneg %p110
      %s200 = smul.u32 32, %s19
      %p201 = scmp.lt.s32.totalorder %s18, 1
      %s202 = scalar_select %p201, %s18, 1
      %p203 = scmp.lt.s32.totalorder %s200, 31
      %s204 = scalar_select %p203, %s200, 31
      %s205 = smul.addr %s202, 32
      %s206 = sadd.s32 %s204, %s205
      %s207 = smul.addr %s206, 8
      %s208 = scalar_lea.vmem %s2, %s207
      %s209 = smul.u32 32, %s19
      %s210 = smul.u32 2, %s20
      %p211 = scmp.lt.s32.totalorder %s18, 1
      %s212 = scalar_select %p211, %s18, 1
      %p213 = scmp.lt.s32.totalorder %s209, 31
      %s214 = scalar_select %p213, %s209, 31
      %p215 = scmp.lt.s32.totalorder %s210, 1
      %s216 = scalar_select %p215, %s210, 1
      %s217 = smul.addr %s214, 2
      %s218 = sadd.s32 %s216, %s217
      %s219 = smul.addr %s212, 64
      %s220 = sadd.s32 %s218, %s219
      %s221 = smul.addr %s220, 8
      %s222 = scalar_lea.vmem %s0, %s221
      %s223 = smul.u32 32, %s19
      %s224 = smul.u32 2, %s20
      %s225 = smul.u32 32, %s20
      %p226 = scmp.lt.s32.totalorder %s18, 1
      %s227 = scalar_select %p226, %s18, 1
      %p228 = scmp.lt.s32.totalorder %s225, 31
      %s229 = scalar_select %p228, %s225, 31
      %s230 = smul.addr %s227, 32
      %s231 = sadd.s32 %s229, %s230
      %s232 = smul.addr %s231, 8
      %s233 = scalar_lea.vmem %s1, %s232
      %s234 = smul.u32 32, %s20
      %s235 = smul.u32 32, %s19
      %p236 = scmp.lt.s32.totalorder %s18, 1
      %s237 = scalar_select %p236, %s18, 1
      %p238 = scmp.lt.s32.totalorder %s235, 31
      %s239 = scalar_select %p238, %s235, 31
      %s240 = smul.addr %s237, 32
      %s241 = sadd.s32 %s239, %s240
      %s242 = smul.addr %s241, 8
      %s243 = scalar_lea.vmem %s2, %s242
      %s244 = smul.u32 32, %s19
      %p245 = scmp.eq.s32.totalorder %s20, 0
      // Predicated region
      $region29: #{online-softmax} parent=27 // pred_check
        %p246 = pneg %p245
      $region30: #{online-softmax} parent=27 // pred_check_branch
        %248 = sbr.rel (%p246) target = $region32
      $region31: #{online-softmax} parent=27 // pred_region
        %vm249 = vcmask 261120
        %250 = vst.msk [vmem:[%s243] sm:$0xff] %vm249, 0.0
        %251 = vst.msk [vmem:[%s243 + $0x8] sm:$0xff] %vm249, 0.0
        %252 = vst.msk [vmem:[%s243 + $0x10] sm:$0xff] %vm249, 0.0
        %253 = vst.msk [vmem:[%s243 + $0x18] sm:$0xff] %vm249, 0.0
        %254 = vst.msk [vmem:[%s243 + $0x20] sm:$0xff] %vm249, 0.0
        %255 = vst.msk [vmem:[%s243 + $0x28] sm:$0xff] %vm249, 0.0
        %256 = vst.msk [vmem:[%s243 + $0x30] sm:$0xff] %vm249, 0.0
        %257 = vst.msk [vmem:[%s243 + $0x38] sm:$0xff] %vm249, 0.0
        %258 = vst.msk [vmem:[%s243 + $0x40] sm:$0xff] %vm249, 0.0
        %259 = vst.msk [vmem:[%s243 + $0x48] sm:$0xff] %vm249, 0.0
        %260 = vst.msk [vmem:[%s243 + $0x50] sm:$0xff] %vm249, 0.0
        %261 = vst.msk [vmem:[%s243 + $0x58] sm:$0xff] %vm249, 0.0
        %262 = vst.msk [vmem:[%s243 + $0x60] sm:$0xff] %vm249, 0.0
        %263 = vst.msk [vmem:[%s243 + $0x68] sm:$0xff] %vm249, 0.0
        %264 = vst.msk [vmem:[%s243 + $0x70] sm:$0xff] %vm249, 0.0
        %265 = vst.msk [vmem:[%s243 + $0x78] sm:$0xff] %vm249, 0.0
        %266 = vst.msk [vmem:[%s243 + $0x80] sm:$0xff] %vm249, 0.0
        %267 = vst.msk [vmem:[%s243 + $0x88] sm:$0xff] %vm249, 0.0
        %268 = vst.msk [vmem:[%s243 + $0x90] sm:$0xff] %vm249, 0.0
        %269 = vst.msk [vmem:[%s243 + $0x98] sm:$0xff] %vm249, 0.0
        %270 = vst.msk [vmem:[%s243 + $0xa0] sm:$0xff] %vm249, 0.0
        %271 = vst.msk [vmem:[%s243 + $0xa8] sm:$0xff] %vm249, 0.0
        %272 = vst.msk [vmem:[%s243 + $0xb0] sm:$0xff] %vm249, 0.0
        %273 = vst.msk [vmem:[%s243 + $0xb8] sm:$0xff] %vm249, 0.0
        %274 = vst.msk [vmem:[%s243 + $0xc0] sm:$0xff] %vm249, 0.0
        %275 = vst.msk [vmem:[%s243 + $0xc8] sm:$0xff] %vm249, 0.0
        %276 = vst.msk [vmem:[%s243 + $0xd0] sm:$0xff] %vm249, 0.0
        %277 = vst.msk [vmem:[%s243 + $0xd8] sm:$0xff] %vm249, 0.0
        %278 = vst.msk [vmem:[%s243 + $0xe0] sm:$0xff] %vm249, 0.0
        %279 = vst.msk [vmem:[%s243 + $0xe8] sm:$0xff] %vm249, 0.0
        %280 = vst.msk [vmem:[%s243 + $0xf0] sm:$0xff] %vm249, 0.0
        %281 = vst.msk [vmem:[%s243 + $0xf8] sm:$0xff] %vm249, 0.0
        %vm282 = vcmask 7168
        %283 = vst.msk [vmem:[#allocation2] sm:$0xff] %vm282, -inf
        %284 = vst.msk [vmem:[#allocation2 + $0x8] sm:$0xff] %vm282, -inf
        %285 = vst.msk [vmem:[#allocation2 + $0x10] sm:$0xff] %vm282, -inf
        %286 = vst.msk [vmem:[#allocation2 + $0x18] sm:$0xff] %vm282, -inf
        %287 = vst.msk [vmem:[#allocation2 + $0x20] sm:$0xff] %vm282, -inf
        %288 = vst.msk [vmem:[#allocation2 + $0x28] sm:$0xff] %vm282, -inf
        %289 = vst.msk [vmem:[#allocation2 + $0x30] sm:$0xff] %vm282, -inf
        %290 = vst.msk [vmem:[#allocation2 + $0x38] sm:$0xff] %vm282, -inf
        %291 = vst.msk [vmem:[#allocation2 + $0x40] sm:$0xff] %vm282, -inf
        %292 = vst.msk [vmem:[#allocation2 + $0x48] sm:$0xff] %vm282, -inf
        %293 = vst.msk [vmem:[#allocation2 + $0x50] sm:$0xff] %vm282, -inf
        %294 = vst.msk [vmem:[#allocation2 + $0x58] sm:$0xff] %vm282, -inf
        %295 = vst.msk [vmem:[#allocation2 + $0x60] sm:$0xff] %vm282, -inf
        %296 = vst.msk [vmem:[#allocation2 + $0x68] sm:$0xff] %vm282, -inf
        %297 = vst.msk [vmem:[#allocation2 + $0x70] sm:$0xff] %vm282, -inf
        %298 = vst.msk [vmem:[#allocation2 + $0x78] sm:$0xff] %vm282, -inf
        %299 = vst.msk [vmem:[#allocation2 + $0x80] sm:$0xff] %vm282, -inf
        %300 = vst.msk [vmem:[#allocation2 + $0x88] sm:$0xff] %vm282, -inf
        %301 = vst.msk [vmem:[#allocation2 + $0x90] sm:$0xff] %vm282, -inf
        %302 = vst.msk [vmem:[#allocation2 + $0x98] sm:$0xff] %vm282, -inf
        %303 = vst.msk [vmem:[#allocation2 + $0xa0] sm:$0xff] %vm282, -inf
        %304 = vst.msk [vmem:[#allocation2 + $0xa8] sm:$0xff] %vm282, -inf
        %305 = vst.msk [vmem:[#allocation2 + $0xb0] sm:$0xff] %vm282, -inf
        %306 = vst.msk [vmem:[#allocation2 + $0xb8] sm:$0xff] %vm282, -inf
        %307 = vst.msk [vmem:[#allocation2 + $0xc0] sm:$0xff] %vm282, -inf
        %308 = vst.msk [vmem:[#allocation2 + $0xc8] sm:$0xff] %vm282, -inf
        %309 = vst.msk [vmem:[#allocation2 + $0xd0] sm:$0xff] %vm282, -inf
        %310 = vst.msk [vmem:[#allocation2 + $0xd8] sm:$0xff] %vm282, -inf
        %311 = vst.msk [vmem:[#allocation2 + $0xe0] sm:$0xff] %vm282, -inf
        %312 = vst.msk [vmem:[#allocation2 + $0xe8] sm:$0xff] %vm282, -inf
        %313 = vst.msk [vmem:[#allocation2 + $0xf0] sm:$0xff] %vm282, -inf
        %314 = vst.msk [vmem:[#allocation2 + $0xf8] sm:$0xff] %vm282, -inf
        %315 = vst.msk [vmem:[#allocation3] sm:$0xff] %vm282, 0.0
        %316 = vst.msk [vmem:[#allocation3 + $0x8] sm:$0xff] %vm282, 0.0
        %317 = vst.msk [vmem:[#allocation3 + $0x10] sm:$0xff] %vm282, 0.0
        %318 = vst.msk [vmem:[#allocation3 + $0x18] sm:$0xff] %vm282, 0.0
        %319 = vst.msk [vmem:[#allocation3 + $0x20] sm:$0xff] %vm282, 0.0
        %320 = vst.msk [vmem:[#allocation3 + $0x28] sm:$0xff] %vm282, 0.0
        %321 = vst.msk [vmem:[#allocation3 + $0x30] sm:$0xff] %vm282, 0.0
        %322 = vst.msk [vmem:[#allocation3 + $0x38] sm:$0xff] %vm282, 0.0
        %323 = vst.msk [vmem:[#allocation3 + $0x40] sm:$0xff] %vm282, 0.0
        %324 = vst.msk [vmem:[#allocation3 + $0x48] sm:$0xff] %vm282, 0.0
        %325 = vst.msk [vmem:[#allocation3 + $0x50] sm:$0xff] %vm282, 0.0
        %326 = vst.msk [vmem:[#allocation3 + $0x58] sm:$0xff] %vm282, 0.0
        %327 = vst.msk [vmem:[#allocation3 + $0x60] sm:$0xff] %vm282, 0.0
        %328 = vst.msk [vmem:[#allocation3 + $0x68] sm:$0xff] %vm282, 0.0
        %329 = vst.msk [vmem:[#allocation3 + $0x70] sm:$0xff] %vm282, 0.0
        %330 = vst.msk [vmem:[#allocation3 + $0x78] sm:$0xff] %vm282, 0.0
        %331 = vst.msk [vmem:[#allocation3 + $0x80] sm:$0xff] %vm282, 0.0
        %332 = vst.msk [vmem:[#allocation3 + $0x88] sm:$0xff] %vm282, 0.0
        %333 = vst.msk [vmem:[#allocation3 + $0x90] sm:$0xff] %vm282, 0.0
        %334 = vst.msk [vmem:[#allocation3 + $0x98] sm:$0xff] %vm282, 0.0
        %335 = vst.msk [vmem:[#allocation3 + $0xa0] sm:$0xff] %vm282, 0.0
        %336 = vst.msk [vmem:[#allocation3 + $0xa8] sm:$0xff] %vm282, 0.0
        %337 = vst.msk [vmem:[#allocation3 + $0xb0] sm:$0xff] %vm282, 0.0
        %338 = vst.msk [vmem:[#allocation3 + $0xb8] sm:$0xff] %vm282, 0.0
        %339 = vst.msk [vmem:[#allocation3 + $0xc0] sm:$0xff] %vm282, 0.0
        %340 = vst.msk [vmem:[#allocation3 + $0xc8] sm:$0xff] %vm282, 0.0
        %341 = vst.msk [vmem:[#allocation3 + $0xd0] sm:$0xff] %vm282, 0.0
        %342 = vst.msk [vmem:[#allocation3 + $0xd8] sm:$0xff] %vm282, 0.0
        %343 = vst.msk [vmem:[#allocation3 + $0xe0] sm:$0xff] %vm282, 0.0
        %344 = vst.msk [vmem:[#allocation3 + $0xe8] sm:$0xff] %vm282, 0.0
        %345 = vst.msk [vmem:[#allocation3 + $0xf0] sm:$0xff] %vm282, 0.0
        %346 = vst.msk [vmem:[#allocation3 + $0xf8] sm:$0xff] %vm282, 0.0
      $region32: #{online-softmax} parent=27 // pred_fallthru
        _
      %v347 = vld [vmem:[%s222] sm:$0xff]
      %v348 = vld [vmem:[%s222 + $0x8] sm:$0xff]
      %v349 = vld [vmem:[%s222 + $0x10] sm:$0xff]
      %v350 = vld [vmem:[%s222 + $0x18] sm:$0xff]
      %v351 = vld [vmem:[%s222 + $0x20] sm:$0xff]
      %v352 = vld [vmem:[%s222 + $0x28] sm:$0xff]
      %v353 = vld [vmem:[%s222 + $0x30] sm:$0xff]
      %v354 = vld [vmem:[%s222 + $0x38] sm:$0xff]
      %v355 = vld [vmem:[%s222 + $0x40] sm:$0xff]
      %v356 = vld [vmem:[%s222 + $0x48] sm:$0xff]
      %v357 = vld [vmem:[%s222 + $0x50] sm:$0xff]
      %v358 = vld [vmem:[%s222 + $0x58] sm:$0xff]
      %v359 = vld [vmem:[%s222 + $0x60] sm:$0xff]
      %v360 = vld [vmem:[%s222 + $0x68] sm:$0xff]
      %v361 = vld [vmem:[%s222 + $0x70] sm:$0xff]
      %v362 = vld [vmem:[%s222 + $0x78] sm:$0xff]
      %v363 = vld [vmem:[%s222 + $0x80] sm:$0xff]
      %v364 = vld [vmem:[%s222 + $0x88] sm:$0xff]
      %v365 = vld [vmem:[%s222 + $0x90] sm:$0xff]
      %v366 = vld [vmem:[%s222 + $0x98] sm:$0xff]
      %v367 = vld [vmem:[%s222 + $0xa0] sm:$0xff]
      %v368 = vld [vmem:[%s222 + $0xa8] sm:$0xff]
      %v369 = vld [vmem:[%s222 + $0xb0] sm:$0xff]
      %v370 = vld [vmem:[%s222 + $0xb8] sm:$0xff]
      %v371 = vld [vmem:[%s222 + $0xc0] sm:$0xff]
      %v372 = vld [vmem:[%s222 + $0xc8] sm:$0xff]
      %v373 = vld [vmem:[%s222 + $0xd0] sm:$0xff]
      %v374 = vld [vmem:[%s222 + $0xd8] sm:$0xff]
      %v375 = vld [vmem:[%s222 + $0xe0] sm:$0xff]
      %v376 = vld [vmem:[%s222 + $0xe8] sm:$0xff]
      %v377 = vld [vmem:[%s222 + $0xf0] sm:$0xff]
      %v378 = vld [vmem:[%s222 + $0xf8] sm:$0xff]
      %v379 = vld [vmem:[%s222 + $0x100] sm:$0xff]
      %v380 = vld [vmem:[%s222 + $0x108] sm:$0xff]
      %v381 = vld [vmem:[%s222 + $0x110] sm:$0xff]
      %v382 = vld [vmem:[%s222 + $0x118] sm:$0xff]
      %v383 = vld [vmem:[%s222 + $0x120] sm:$0xff]
      %v384 = vld [vmem:[%s222 + $0x128] sm:$0xff]
      %v385 = vld [vmem:[%s222 + $0x130] sm:$0xff]
      %v386 = vld [vmem:[%s222 + $0x138] sm:$0xff]
      %v387 = vld [vmem:[%s222 + $0x140] sm:$0xff]
      %v388 = vld [vmem:[%s222 + $0x148] sm:$0xff]
      %v389 = vld [vmem:[%s222 + $0x150] sm:$0xff]
      %v390 = vld [vmem:[%s222 + $0x158] sm:$0xff]
      %v391 = vld [vmem:[%s222 + $0x160] sm:$0xff]
      %v392 = vld [vmem:[%s222 + $0x168] sm:$0xff]
      %v393 = vld [vmem:[%s222 + $0x170] sm:$0xff]
      %v394 = vld [vmem:[%s222 + $0x178] sm:$0xff]
      %v395 = vld [vmem:[%s222 + $0x180] sm:$0xff]
      %v396 = vld [vmem:[%s222 + $0x188] sm:$0xff]
      %v397 = vld [vmem:[%s222 + $0x190] sm:$0xff]
      %v398 = vld [vmem:[%s222 + $0x198] sm:$0xff]
      %v399 = vld [vmem:[%s222 + $0x1a0] sm:$0xff]
      %v400 = vld [vmem:[%s222 + $0x1a8] sm:$0xff]
      %v401 = vld [vmem:[%s222 + $0x1b0] sm:$0xff]
      %v402 = vld [vmem:[%s222 + $0x1b8] sm:$0xff]
      %v403 = vld [vmem:[%s222 + $0x1c0] sm:$0xff]
      %v404 = vld [vmem:[%s222 + $0x1c8] sm:$0xff]
      %v405 = vld [vmem:[%s222 + $0x1d0] sm:$0xff]
      %v406 = vld [vmem:[%s222 + $0x1d8] sm:$0xff]
      %v407 = vld [vmem:[%s222 + $0x1e0] sm:$0xff]
      %v408 = vld [vmem:[%s222 + $0x1e8] sm:$0xff]
      %v409 = vld [vmem:[%s222 + $0x1f0] sm:$0xff]
      %v410 = vld [vmem:[%s222 + $0x1f8] sm:$0xff]
      %v411 = vmax.f32 %v347, %v348
      %412 = vmax.xlane.f32.xlu0 %v411
      %v413 = vpop.xlane.xlu0 %412
      %v414 = vmax.f32 %v349, %v350
      %415 = vmax.xlane.f32.xlu0 %v414
      %v416 = vpop.xlane.xlu0 %415
      %v417 = vmax.f32 %v351, %v352
      %418 = vmax.xlane.f32.xlu0 %v417
      %v419 = vpop.xlane.xlu0 %418
      %v420 = vmax.f32 %v353, %v354
      %421 = vmax.xlane.f32.xlu0 %v420
      %v422 = vpop.xlane.xlu0 %421
      %v423 = vmax.f32 %v355, %v356
      %424 = vmax.xlane.f32.xlu0 %v423
      %v425 = vpop.xlane.xlu0 %424
      %v426 = vmax.f32 %v357, %v358
      %427 = vmax.xlane.f32.xlu0 %v426
      %v428 = vpop.xlane.xlu0 %427
      %v429 = vmax.f32 %v359, %v360
      %430 = vmax.xlane.f32.xlu0 %v429
      %v431 = vpop.xlane.xlu0 %430
      %v432 = vmax.f32 %v361, %v362
      %433 = vmax.xlane.f32.xlu0 %v432
      %v434 = vpop.xlane.xlu0 %433
      %v435 = vmax.f32 %v363, %v364
      %436 = vmax.xlane.f32.xlu0 %v435
      %v437 = vpop.xlane.xlu0 %436
      %v438 = vmax.f32 %v365, %v366
      %439 = vmax.xlane.f32.xlu0 %v438
      %v440 = vpop.xlane.xlu0 %439
      %v441 = vmax.f32 %v367, %v368
      %442 = vmax.xlane.f32.xlu0 %v441
      %v443 = vpop.xlane.xlu0 %442
      %v444 = vmax.f32 %v369, %v370
      %445 = vmax.xlane.f32.xlu0 %v444
      %v446 = vpop.xlane.xlu0 %445
      %v447 = vmax.f32 %v371, %v372
      %448 = vmax.xlane.f32.xlu0 %v447
      %v449 = vpop.xlane.xlu0 %448
      %v450 = vmax.f32 %v373, %v374
      %451 = vmax.xlane.f32.xlu0 %v450
      %v452 = vpop.xlane.xlu0 %451
      %v453 = vmax.f32 %v375, %v376
      %454 = vmax.xlane.f32.xlu0 %v453
      %v455 = vpop.xlane.xlu0 %454
      %v456 = vmax.f32 %v377, %v378
      %457 = vmax.xlane.f32.xlu0 %v456
      %v458 = vpop.xlane.xlu0 %457
      %v459 = vmax.f32 %v379, %v380
      %460 = vmax.xlane.f32.xlu0 %v459
      %v461 = vpop.xlane.xlu0 %460
      %v462 = vmax.f32 %v381, %v382
      %463 = vmax.xlane.f32.xlu0 %v462
      %v464 = vpop.xlane.xlu0 %463
      %v465 = vmax.f32 %v383, %v384
      %466 = vmax.xlane.f32.xlu0 %v465
      %v467 = vpop.xlane.xlu0 %466
      %v468 = vmax.f32 %v385, %v386
      %469 = vmax.xlane.f32.xlu0 %v468
      %v470 = vpop.xlane.xlu0 %469
      %v471 = vmax.f32 %v387, %v388
      %472 = vmax.xlane.f32.xlu0 %v471
      %v473 = vpop.xlane.xlu0 %472
      %v474 = vmax.f32 %v389, %v390
      %475 = vmax.xlane.f32.xlu0 %v474
      %v476 = vpop.xlane.xlu0 %475
      %v477 = vmax.f32 %v391, %v392
      %478 = vmax.xlane.f32.xlu0 %v477
      %v479 = vpop.xlane.xlu0 %478
      %v480 = vmax.f32 %v393, %v394
      %481 = vmax.xlane.f32.xlu0 %v480
      %v482 = vpop.xlane.xlu0 %481
      %v483 = vmax.f32 %v395, %v396
      %484 = vmax.xlane.f32.xlu0 %v483
      %v485 = vpop.xlane.xlu0 %484
      %v486 = vmax.f32 %v397, %v398
      %487 = vmax.xlane.f32.xlu0 %v486
      %v488 = vpop.xlane.xlu0 %487
      %v489 = vmax.f32 %v399, %v400
      %490 = vmax.xlane.f32.xlu0 %v489
      %v491 = vpop.xlane.xlu0 %490
      %v492 = vmax.f32 %v401, %v402
      %493 = vmax.xlane.f32.xlu0 %v492
      %v494 = vpop.xlane.xlu0 %493
      %v495 = vmax.f32 %v403, %v404
      %496 = vmax.xlane.f32.xlu0 %v495
      %v497 = vpop.xlane.xlu0 %496
      %v498 = vmax.f32 %v405, %v406
      %499 = vmax.xlane.f32.xlu0 %v498
      %v500 = vpop.xlane.xlu0 %499
      %v501 = vmax.f32 %v407, %v408
      %502 = vmax.xlane.f32.xlu0 %v501
      %v503 = vpop.xlane.xlu0 %502
      %v504 = vmax.f32 %v409, %v410
      %505 = vmax.xlane.f32.xlu0 %v504
      %v506 = vpop.xlane.xlu0 %505
      %v507 = vld [vmem:[#allocation2] sm:$0xff]
      %v508 = vld [vmem:[#allocation2 + $0x8] sm:$0xff]
      %v509 = vld [vmem:[#allocation2 + $0x10] sm:$0xff]
      %v510 = vld [vmem:[#allocation2 + $0x18] sm:$0xff]
      %v511 = vld [vmem:[#allocation2 + $0x20] sm:$0xff]
      %v512 = vld [vmem:[#allocation2 + $0x28] sm:$0xff]
      %v513 = vld [vmem:[#allocation2 + $0x30] sm:$0xff]
      %v514 = vld [vmem:[#allocation2 + $0x38] sm:$0xff]
      %v515 = vld [vmem:[#allocation2 + $0x40] sm:$0xff]
      %v516 = vld [vmem:[#allocation2 + $0x48] sm:$0xff]
      %v517 = vld [vmem:[#allocation2 + $0x50] sm:$0xff]
      %v518 = vld [vmem:[#allocation2 + $0x58] sm:$0xff]
      %v519 = vld [vmem:[#allocation2 + $0x60] sm:$0xff]
      %v520 = vld [vmem:[#allocation2 + $0x68] sm:$0xff]
      %v521 = vld [vmem:[#allocation2 + $0x70] sm:$0xff]
      %v522 = vld [vmem:[#allocation2 + $0x78] sm:$0xff]
      %v523 = vld [vmem:[#allocation2 + $0x80] sm:$0xff]
      %v524 = vld [vmem:[#allocation2 + $0x88] sm:$0xff]
      %v525 = vld [vmem:[#allocation2 + $0x90] sm:$0xff]
      %v526 = vld [vmem:[#allocation2 + $0x98] sm:$0xff]
      %v527 = vld [vmem:[#allocation2 + $0xa0] sm:$0xff]
      %v528 = vld [vmem:[#allocation2 + $0xa8] sm:$0xff]
      %v529 = vld [vmem:[#allocation2 + $0xb0] sm:$0xff]
      %v530 = vld [vmem:[#allocation2 + $0xb8] sm:$0xff]
      %v531 = vld [vmem:[#allocation2 + $0xc0] sm:$0xff]
      %v532 = vld [vmem:[#allocation2 + $0xc8] sm:$0xff]
      %v533 = vld [vmem:[#allocation2 + $0xd0] sm:$0xff]
      %v534 = vld [vmem:[#allocation2 + $0xd8] sm:$0xff]
      %v535 = vld [vmem:[#allocation2 + $0xe0] sm:$0xff]
      %v536 = vld [vmem:[#allocation2 + $0xe8] sm:$0xff]
      %v537 = vld [vmem:[#allocation2 + $0xf0] sm:$0xff]
      %v538 = vld [vmem:[#allocation2 + $0xf8] sm:$0xff]
      %v539 = vmax.f32 %v507, %v413
      %v540 = vmax.f32 %v508, %v416
      %v541 = vmax.f32 %v509, %v419
      %v542 = vmax.f32 %v510, %v422
      %v543 = vmax.f32 %v511, %v425
      %v544 = vmax.f32 %v512, %v428
      %v545 = vmax.f32 %v513, %v431
      %v546 = vmax.f32 %v514, %v434
      %v547 = vmax.f32 %v515, %v437
      %v548 = vmax.f32 %v516, %v440
      %v549 = vmax.f32 %v517, %v443
      %v550 = vmax.f32 %v518, %v446
      %v551 = vmax.f32 %v519, %v449
      %v552 = vmax.f32 %v520, %v452
      %v553 = vmax.f32 %v521, %v455
      %v554 = vmax.f32 %v522, %v458
      %v555 = vmax.f32 %v523, %v461
      %v556 = vmax.f32 %v524, %v464
      %v557 = vmax.f32 %v525, %v467
      %v558 = vmax.f32 %v526, %v470
      %v559 = vmax.f32 %v527, %v473
      %v560 = vmax.f32 %v528, %v476
      %v561 = vmax.f32 %v529, %v479
      %v562 = vmax.f32 %v530, %v482
      %v563 = vmax.f32 %v531, %v485
      %v564 = vmax.f32 %v532, %v488
      %v565 = vmax.f32 %v533, %v491
      %v566 = vmax.f32 %v534, %v494
      %v567 = vmax.f32 %v535, %v497
      %v568 = vmax.f32 %v536, %v500
      %v569 = vmax.f32 %v537, %v503
      %v570 = vmax.f32 %v538, %v506
      %vm571 = vcmp.eq.f32.partialorder %v507, %v539
      %vm572 = vcmp.eq.f32.partialorder %v508, %v540
      %vm573 = vcmp.eq.f32.partialorder %v509, %v541
      %vm574 = vcmp.eq.f32.partialorder %v510, %v542
      %vm575 = vcmp.eq.f32.partialorder %v511, %v543
      %vm576 = vcmp.eq.f32.partialorder %v512, %v544
      %vm577 = vcmp.eq.f32.partialorder %v513, %v545
      %vm578 = vcmp.eq.f32.partialorder %v514, %v546
      %vm579 = vcmp.eq.f32.partialorder %v515, %v547
      %vm580 = vcmp.eq.f32.partialorder %v516, %v548
      %vm581 = vcmp.eq.f32.partialorder %v517, %v549
      %vm582 = vcmp.eq.f32.partialorder %v518, %v550
      %vm583 = vcmp.eq.f32.partialorder %v519, %v551
      %vm584 = vcmp.eq.f32.partialorder %v520, %v552
      %vm585 = vcmp.eq.f32.partialorder %v521, %v553
      %vm586 = vcmp.eq.f32.partialorder %v522, %v554
      %vm587 = vcmp.eq.f32.partialorder %v523, %v555
      %vm588 = vcmp.eq.f32.partialorder %v524, %v556
      %vm589 = vcmp.eq.f32.partialorder %v525, %v557
      %vm590 = vcmp.eq.f32.partialorder %v526, %v558
      %vm591 = vcmp.eq.f32.partialorder %v527, %v559
      %vm592 = vcmp.eq.f32.partialorder %v528, %v560
      %vm593 = vcmp.eq.f32.partialorder %v529, %v561
      %vm594 = vcmp.eq.f32.partialorder %v530, %v562
      %vm595 = vcmp.eq.f32.partialorder %v531, %v563
      %vm596 = vcmp.eq.f32.partialorder %v532, %v564
      %vm597 = vcmp.eq.f32.partialorder %v533, %v565
      %vm598 = vcmp.eq.f32.partialorder %v534, %v566
      %vm599 = vcmp.eq.f32.partialorder %v535, %v567
      %vm600 = vcmp.eq.f32.partialorder %v536, %v568
      %vm601 = vcmp.eq.f32.partialorder %v537, %v569
      %vm602 = vcmp.eq.f32.partialorder %v538, %v570
      %v603 = vsub.f32 %v507, %v539
      %v604 = vsub.f32 %v508, %v540
      %v605 = vsub.f32 %v509, %v541
      %v606 = vsub.f32 %v510, %v542
      %v607 = vsub.f32 %v511, %v543
      %v608 = vsub.f32 %v512, %v544
      %v609 = vsub.f32 %v513, %v545
      %v610 = vsub.f32 %v514, %v546
      %v611 = vsub.f32 %v515, %v547
      %v612 = vsub.f32 %v516, %v548
      %v613 = vsub.f32 %v517, %v549
      %v614 = vsub.f32 %v518, %v550
      %v615 = vsub.f32 %v519, %v551
      %v616 = vsub.f32 %v520, %v552
      %v617 = vsub.f32 %v521, %v553
      %v618 = vsub.f32 %v522, %v554
      %v619 = vsub.f32 %v523, %v555
      %v620 = vsub.f32 %v524, %v556
      %v621 = vsub.f32 %v525, %v557
      %v622 = vsub.f32 %v526, %v558
      %v623 = vsub.f32 %v527, %v559
      %v624 = vsub.f32 %v528, %v560
      %v625 = vsub.f32 %v529, %v561
      %v626 = vsub.f32 %v530, %v562
      %v627 = vsub.f32 %v531, %v563
      %v628 = vsub.f32 %v532, %v564
      %v629 = vsub.f32 %v533, %v565
      %v630 = vsub.f32 %v534, %v566
      %v631 = vsub.f32 %v535, %v567
      %v632 = vsub.f32 %v536, %v568
      %v633 = vsub.f32 %v537, %v569
      %v634 = vsub.f32 %v538, %v570
      %v635 = vsel %vm571, 0.0, %v603
      %v636 = vsel %vm572, 0.0, %v604
      %v637 = vsel %vm573, 0.0, %v605
      %v638 = vsel %vm574, 0.0, %v606
      %v639 = vsel %vm575, 0.0, %v607
      %v640 = vsel %vm576, 0.0, %v608
      %v641 = vsel %vm577, 0.0, %v609
      %v642 = vsel %vm578, 0.0, %v610
      %v643 = vsel %vm579, 0.0, %v611
      %v644 = vsel %vm580, 0.0, %v612
      %v645 = vsel %vm581, 0.0, %v613
      %v646 = vsel %vm582, 0.0, %v614
      %v647 = vsel %vm583, 0.0, %v615
      %v648 = vsel %vm584, 0.0, %v616
      %v649 = vsel %vm585, 0.0, %v617
      %v650 = vsel %vm586, 0.0, %v618
      %v651 = vsel %vm587, 0.0, %v619
      %v652 = vsel %vm588, 0.0, %v620
      %v653 = vsel %vm589, 0.0, %v621
      %v654 = vsel %vm590, 0.0, %v622
      %v655 = vsel %vm591, 0.0, %v623
      %v656 = vsel %vm592, 0.0, %v624
      %v657 = vsel %vm593, 0.0, %v625
      %v658 = vsel %vm594, 0.0, %v626
      %v659 = vsel %vm595, 0.0, %v627
      %v660 = vsel %vm596, 0.0, %v628
      %v661 = vsel %vm597, 0.0, %v629
      %v662 = vsel %vm598, 0.0, %v630
      %v663 = vsel %vm599, 0.0, %v631
      %v664 = vsel %vm600, 0.0, %v632
      %v665 = vsel %vm601, 0.0, %v633
      %v666 = vsel %vm602, 0.0, %v634
      %668 = vset.pattern.permute.xlu0 0
      %669 = vperm.xlu0 %668, %v539
      %v670 = vpop.permute.xlu0 %669
      %673 = vset.pattern.permute.xlu0 0
      %674 = vperm.xlu0 %673, %v540
      %v675 = vpop.permute.xlu0 %674
      %678 = vset.pattern.permute.xlu0 0
      %679 = vperm.xlu0 %678, %v541
      %v680 = vpop.permute.xlu0 %679
      %683 = vset.pattern.permute.xlu0 0
      %684 = vperm.xlu0 %683, %v542
      %v685 = vpop.permute.xlu0 %684
      %688 = vset.pattern.permute.xlu0 0
      %689 = vperm.xlu0 %688, %v543
      %v690 = vpop.permute.xlu0 %689
      %693 = vset.pattern.permute.xlu0 0
      %694 = vperm.xlu0 %693, %v544
      %v695 = vpop.permute.xlu0 %694
      %698 = vset.pattern.permute.xlu0 0
      %699 = vperm.xlu0 %698, %v545
      %v700 = vpop.permute.xlu0 %699
      %703 = vset.pattern.permute.xlu0 0
      %704 = vperm.xlu0 %703, %v546
      %v705 = vpop.permute.xlu0 %704
      %708 = vset.pattern.permute.xlu0 0
      %709 = vperm.xlu0 %708, %v547
      %v710 = vpop.permute.xlu0 %709
      %713 = vset.pattern.permute.xlu0 0
      %714 = vperm.xlu0 %713, %v548
      %v715 = vpop.permute.xlu0 %714
      %718 = vset.pattern.permute.xlu0 0
      %719 = vperm.xlu0 %718, %v549
      %v720 = vpop.permute.xlu0 %719
      %723 = vset.pattern.permute.xlu0 0
      %724 = vperm.xlu0 %723, %v550
      %v725 = vpop.permute.xlu0 %724
      %728 = vset.pattern.permute.xlu0 0
      %729 = vperm.xlu0 %728, %v551
      %v730 = vpop.permute.xlu0 %729
      %733 = vset.pattern.permute.xlu0 0
      %734 = vperm.xlu0 %733, %v552
      %v735 = vpop.permute.xlu0 %734
      %738 = vset.pattern.permute.xlu0 0
      %739 = vperm.xlu0 %738, %v553
      %v740 = vpop.permute.xlu0 %739
      %743 = vset.pattern.permute.xlu0 0
      %744 = vperm.xlu0 %743, %v554
      %v745 = vpop.permute.xlu0 %744
      %748 = vset.pattern.permute.xlu0 0
      %749 = vperm.xlu0 %748, %v555
      %v750 = vpop.permute.xlu0 %749
      %753 = vset.pattern.permute.xlu0 0
      %754 = vperm.xlu0 %753, %v556
      %v755 = vpop.permute.xlu0 %754
      %758 = vset.pattern.permute.xlu0 0
      %759 = vperm.xlu0 %758, %v557
      %v760 = vpop.permute.xlu0 %759
      %763 = vset.pattern.permute.xlu0 0
      %764 = vperm.xlu0 %763, %v558
      %v765 = vpop.permute.xlu0 %764
      %768 = vset.pattern.permute.xlu0 0
      %769 = vperm.xlu0 %768, %v559
      %v770 = vpop.permute.xlu0 %769
      %773 = vset.pattern.permute.xlu0 0
      %774 = vperm.xlu0 %773, %v560
      %v775 = vpop.permute.xlu0 %774
      %778 = vset.pattern.permute.xlu0 0
      %779 = vperm.xlu0 %778, %v561
      %v780 = vpop.permute.xlu0 %779
      %783 = vset.pattern.permute.xlu0 0
      %784 = vperm.xlu0 %783, %v562
      %v785 = vpop.permute.xlu0 %784
      %788 = vset.pattern.permute.xlu0 0
      %789 = vperm.xlu0 %788, %v563
      %v790 = vpop.permute.xlu0 %789
      %793 = vset.pattern.permute.xlu0 0
      %794 = vperm.xlu0 %793, %v564
      %v795 = vpop.permute.xlu0 %794
      %798 = vset.pattern.permute.xlu0 0
      %799 = vperm.xlu0 %798, %v565
      %v800 = vpop.permute.xlu0 %799
      %803 = vset.pattern.permute.xlu0 0
      %804 = vperm.xlu0 %803, %v566
      %v805 = vpop.permute.xlu0 %804
      %808 = vset.pattern.permute.xlu0 0
      %809 = vperm.xlu0 %808, %v567
      %v810 = vpop.permute.xlu0 %809
      %813 = vset.pattern.permute.xlu0 0
      %814 = vperm.xlu0 %813, %v568
      %v815 = vpop.permute.xlu0 %814
      %818 = vset.pattern.permute.xlu0 0
      %819 = vperm.xlu0 %818, %v569
      %v820 = vpop.permute.xlu0 %819
      %823 = vset.pattern.permute.xlu0 0
      %824 = vperm.xlu0 %823, %v570
      %v825 = vpop.permute.xlu0 %824
      %v827 = vsub.f32 %v347, %v670
      %v828 = vsub.f32 %v348, %v670
      %v829 = vsub.f32 %v349, %v675
      %v830 = vsub.f32 %v350, %v675
      %v831 = vsub.f32 %v351, %v680
      %v832 = vsub.f32 %v352, %v680
      %v833 = vsub.f32 %v353, %v685
      %v834 = vsub.f32 %v354, %v685
      %v835 = vsub.f32 %v355, %v690
      %v836 = vsub.f32 %v356, %v690
      %v837 = vsub.f32 %v357, %v695
      %v838 = vsub.f32 %v358, %v695
      %v839 = vsub.f32 %v359, %v700
      %v840 = vsub.f32 %v360, %v700
      %v841 = vsub.f32 %v361, %v705
      %v842 = vsub.f32 %v362, %v705
      %v843 = vsub.f32 %v363, %v710
      %v844 = vsub.f32 %v364, %v710
      %v845 = vsub.f32 %v365, %v715
      %v846 = vsub.f32 %v366, %v715
      %v847 = vsub.f32 %v367, %v720
      %v848 = vsub.f32 %v368, %v720
      %v849 = vsub.f32 %v369, %v725
      %v850 = vsub.f32 %v370, %v725
      %v851 = vsub.f32 %v371, %v730
      %v852 = vsub.f32 %v372, %v730
      %v853 = vsub.f32 %v373, %v735
      %v854 = vsub.f32 %v374, %v735
      %v855 = vsub.f32 %v375, %v740
      %v856 = vsub.f32 %v376, %v740
      %v857 = vsub.f32 %v377, %v745
      %v858 = vsub.f32 %v378, %v745
      %v859 = vsub.f32 %v379, %v750
      %v860 = vsub.f32 %v380, %v750
      %v861 = vsub.f32 %v381, %v755
      %v862 = vsub.f32 %v382, %v755
      %v863 = vsub.f32 %v383, %v760
      %v864 = vsub.f32 %v384, %v760
      %v865 = vsub.f32 %v385, %v765
      %v866 = vsub.f32 %v386, %v765
      %v867 = vsub.f32 %v387, %v770
      %v868 = vsub.f32 %v388, %v770
      %v869 = vsub.f32 %v389, %v775
      %v870 = vsub.f32 %v390, %v775
      %v871 = vsub.f32 %v391, %v780
      %v872 = vsub.f32 %v392, %v780
      %v873 = vsub.f32 %v393, %v785
      %v874 = vsub.f32 %v394, %v785
      %v875 = vsub.f32 %v395, %v790
      %v876 = vsub.f32 %v396, %v790
      %v877 = vsub.f32 %v397, %v795
      %v878 = vsub.f32 %v398, %v795
      %v879 = vsub.f32 %v399, %v800
      %v880 = vsub.f32 %v400, %v800
      %v881 = vsub.f32 %v401, %v805
      %v882 = vsub.f32 %v402, %v805
      %v883 = vsub.f32 %v403, %v810
      %v884 = vsub.f32 %v404, %v810
      %v885 = vsub.f32 %v405, %v815
      %v886 = vsub.f32 %v406, %v815
      %v887 = vsub.f32 %v407, %v820
      %v888 = vsub.f32 %v408, %v820
      %v889 = vsub.f32 %v409, %v825
      %v890 = vsub.f32 %v410, %v825
      %v891 = vmul.f32 %v827, 1.442695
      %v892 = vpow.pop %v891
      %v893 = vmul.f32 %v828, 1.442695
      %v894 = vpow.pop %v893
      %v895 = vmul.f32 %v829, 1.442695
      %v896 = vpow.pop %v895
      %v897 = vmul.f32 %v830, 1.442695
      %v898 = vpow.pop %v897
      %v899 = vmul.f32 %v831, 1.442695
      %v900 = vpow.pop %v899
      %v901 = vmul.f32 %v832, 1.442695
      %v902 = vpow.pop %v901
      %v903 = vmul.f32 %v833, 1.442695
      %v904 = vpow.pop %v903
      %v905 = vmul.f32 %v834, 1.442695
      %v906 = vpow.pop %v905
      %v907 = vmul.f32 %v835, 1.442695
      %v908 = vpow.pop %v907
      %v909 = vmul.f32 %v836, 1.442695
      %v910 = vpow.pop %v909
      %v911 = vmul.f32 %v837, 1.442695
      %v912 = vpow.pop %v911
      %v913 = vmul.f32 %v838, 1.442695
      %v914 = vpow.pop %v913
      %v915 = vmul.f32 %v839, 1.442695
      %v916 = vpow.pop %v915
      %v917 = vmul.f32 %v840, 1.442695
      %v918 = vpow.pop %v917
      %v919 = vmul.f32 %v841, 1.442695
      %v920 = vpow.pop %v919
      %v921 = vmul.f32 %v842, 1.442695
      %v922 = vpow.pop %v921
      %v923 = vmul.f32 %v843, 1.442695
      %v924 = vpow.pop %v923
      %v925 = vmul.f32 %v844, 1.442695
      %v926 = vpow.pop %v925
      %v927 = vmul.f32 %v845, 1.442695
      %v928 = vpow.pop %v927
      %v929 = vmul.f32 %v846, 1.442695
      %v930 = vpow.pop %v929
      %v931 = vmul.f32 %v847, 1.442695
      %v932 = vpow.pop %v931
      %v933 = vmul.f32 %v848, 1.442695
      %v934 = vpow.pop %v933
      %v935 = vmul.f32 %v849, 1.442695
      %v936 = vpow.pop %v935
      %v937 = vmul.f32 %v850, 1.442695
      %v938 = vpow.pop %v937
      %v939 = vmul.f32 %v851, 1.442695
      %v940 = vpow.pop %v939
      %v941 = vmul.f32 %v852, 1.442695
      %v942 = vpow.pop %v941
      %v943 = vmul.f32 %v853, 1.442695
      %v944 = vpow.pop %v943
      %v945 = vmul.f32 %v854, 1.442695
      %v946 = vpow.pop %v945
      %v947 = vmul.f32 %v855, 1.442695
      %v948 = vpow.pop %v947
      %v949 = vmul.f32 %v856, 1.442695
      %v950 = vpow.pop %v949
      %v951 = vmul.f32 %v857, 1.442695
      %v952 = vpow.pop %v951
      %v953 = vmul.f32 %v858, 1.442695
      %v954 = vpow.pop %v953
      %v955 = vmul.f32 %v859, 1.442695
      %v956 = vpow.pop %v955
      %v957 = vmul.f32 %v860, 1.442695
      %v958 = vpow.pop %v957
      %v959 = vmul.f32 %v861, 1.442695
      %v960 = vpow.pop %v959
      %v961 = vmul.f32 %v862, 1.442695
      %v962 = vpow.pop %v961
      %v963 = vmul.f32 %v863, 1.442695
      %v964 = vpow.pop %v963
      %v965 = vmul.f32 %v864, 1.442695
      %v966 = vpow.pop %v965
      %v967 = vmul.f32 %v865, 1.442695
      %v968 = vpow.pop %v967
      %v969 = vmul.f32 %v866, 1.442695
      %v970 = vpow.pop %v969
      %v971 = vmul.f32 %v867, 1.442695
      %v972 = vpow.pop %v971
      %v973 = vmul.f32 %v868, 1.442695
      %v974 = vpow.pop %v973
      %v975 = vmul.f32 %v869, 1.442695
      %v976 = vpow.pop %v975
      %v977 = vmul.f32 %v870, 1.442695
      %v978 = vpow.pop %v977
      %v979 = vmul.f32 %v871, 1.442695
      %v980 = vpow.pop %v979
      %v981 = vmul.f32 %v872, 1.442695
      %v982 = vpow.pop %v981
      %v983 = vmul.f32 %v873, 1.442695
      %v984 = vpow.pop %v983
      %v985 = vmul.f32 %v874, 1.442695
      %v986 = vpow.pop %v985
      %v987 = vmul.f32 %v875, 1.442695
      %v988 = vpow.pop %v987
      %v989 = vmul.f32 %v876, 1.442695
      %v990 = vpow.pop %v989
      %v991 = vmul.f32 %v877, 1.442695
      %v992 = vpow.pop %v991
      %v993 = vmul.f32 %v878, 1.442695
      %v994 = vpow.pop %v993
      %v995 = vmul.f32 %v879, 1.442695
      %v996 = vpow.pop %v995
      %v997 = vmul.f32 %v880, 1.442695
      %v998 = vpow.pop %v997
      %v999 = vmul.f32 %v881, 1.442695
      %v1000 = vpow.pop %v999
      %v1001 = vmul.f32 %v882, 1.442695
      %v1002 = vpow.pop %v1001
      %v1003 = vmul.f32 %v883, 1.442695
      %v1004 = vpow.pop %v1003
      %v1005 = vmul.f32 %v884, 1.442695
      %v1006 = vpow.pop %v1005
      %v1007 = vmul.f32 %v885, 1.442695
      %v1008 = vpow.pop %v1007
      %v1009 = vmul.f32 %v886, 1.442695
      %v1010 = vpow.pop %v1009
      %v1011 = vmul.f32 %v887, 1.442695
      %v1012 = vpow.pop %v1011
      %v1013 = vmul.f32 %v888, 1.442695
      %v1014 = vpow.pop %v1013
      %v1015 = vmul.f32 %v889, 1.442695
      %v1016 = vpow.pop %v1015
      %v1017 = vmul.f32 %v890, 1.442695
      %v1018 = vpow.pop %v1017
      %v1019 = vadd.f32 %v892, %v894
      %1020 = vadd.xlane.f32.xlu0 %v1019
      %v1021 = vpop.xlane.xlu0 %1020
      %v1022 = vadd.f32 %v896, %v898
      %1023 = vadd.xlane.f32.xlu0 %v1022
      %v1024 = vpop.xlane.xlu0 %1023
      %v1025 = vadd.f32 %v900, %v902
      %1026 = vadd.xlane.f32.xlu0 %v1025
      %v1027 = vpop.xlane.xlu0 %1026
      %v1028 = vadd.f32 %v904, %v906
      %1029 = vadd.xlane.f32.xlu0 %v1028
      %v1030 = vpop.xlane.xlu0 %1029
      %v1031 = vadd.f32 %v908, %v910
      %1032 = vadd.xlane.f32.xlu0 %v1031
      %v1033 = vpop.xlane.xlu0 %1032
      %v1034 = vadd.f32 %v912, %v914
      %1035 = vadd.xlane.f32.xlu0 %v1034
      %v1036 = vpop.xlane.xlu0 %1035
      %v1037 = vadd.f32 %v916, %v918
      %1038 = vadd.xlane.f32.xlu0 %v1037
      %v1039 = vpop.xlane.xlu0 %1038
      %v1040 = vadd.f32 %v920, %v922
      %1041 = vadd.xlane.f32.xlu0 %v1040
      %v1042 = vpop.xlane.xlu0 %1041
      %v1043 = vadd.f32 %v924, %v926
      %1044 = vadd.xlane.f32.xlu0 %v1043
      %v1045 = vpop.xlane.xlu0 %1044
      %v1046 = vadd.f32 %v928, %v930
      %1047 = vadd.xlane.f32.xlu0 %v1046
      %v1048 = vpop.xlane.xlu0 %1047
      %v1049 = vadd.f32 %v932, %v934
      %1050 = vadd.xlane.f32.xlu0 %v1049
      %v1051 = vpop.xlane.xlu0 %1050
      %v1052 = vadd.f32 %v936, %v938
      %1053 = vadd.xlane.f32.xlu0 %v1052
      %v1054 = vpop.xlane.xlu0 %1053
      %v1055 = vadd.f32 %v940, %v942
      %1056 = vadd.xlane.f32.xlu0 %v1055
      %v1057 = vpop.xlane.xlu0 %1056
      %v1058 = vadd.f32 %v944, %v946
      %1059 = vadd.xlane.f32.xlu0 %v1058
      %v1060 = vpop.xlane.xlu0 %1059
      %v1061 = vadd.f32 %v948, %v950
      %1062 = vadd.xlane.f32.xlu0 %v1061
      %v1063 = vpop.xlane.xlu0 %1062
      %v1064 = vadd.f32 %v952, %v954
      %1065 = vadd.xlane.f32.xlu0 %v1064
      %v1066 = vpop.xlane.xlu0 %1065
      %v1067 = vadd.f32 %v956, %v958
      %1068 = vadd.xlane.f32.xlu0 %v1067
      %v1069 = vpop.xlane.xlu0 %1068
      %v1070 = vadd.f32 %v960, %v962
      %1071 = vadd.xlane.f32.xlu0 %v1070
      %v1072 = vpop.xlane.xlu0 %1071
      %v1073 = vadd.f32 %v964, %v966
      %1074 = vadd.xlane.f32.xlu0 %v1073
      %v1075 = vpop.xlane.xlu0 %1074
      %v1076 = vadd.f32 %v968, %v970
      %1077 = vadd.xlane.f32.xlu0 %v1076
      %v1078 = vpop.xlane.xlu0 %1077
      %v1079 = vadd.f32 %v972, %v974
      %1080 = vadd.xlane.f32.xlu0 %v1079
      %v1081 = vpop.xlane.xlu0 %1080
      %v1082 = vadd.f32 %v976, %v978
      %1083 = vadd.xlane.f32.xlu0 %v1082
      %v1084 = vpop.xlane.xlu0 %1083
      %v1085 = vadd.f32 %v980, %v982
      %1086 = vadd.xlane.f32.xlu0 %v1085
      %v1087 = vpop.xlane.xlu0 %1086
      %v1088 = vadd.f32 %v984, %v986
      %1089 = vadd.xlane.f32.xlu0 %v1088
      %v1090 = vpop.xlane.xlu0 %1089
      %v1091 = vadd.f32 %v988, %v990
      %1092 = vadd.xlane.f32.xlu0 %v1091
      %v1093 = vpop.xlane.xlu0 %1092
      %v1094 = vadd.f32 %v992, %v994
      %1095 = vadd.xlane.f32.xlu0 %v1094
      %v1096 = vpop.xlane.xlu0 %1095
      %v1097 = vadd.f32 %v996, %v998
      %1098 = vadd.xlane.f32.xlu0 %v1097
      %v1099 = vpop.xlane.xlu0 %1098
      %v1100 = vadd.f32 %v1000, %v1002
      %1101 = vadd.xlane.f32.xlu0 %v1100
      %v1102 = vpop.xlane.xlu0 %1101
      %v1103 = vadd.f32 %v1004, %v1006
      %1104 = vadd.xlane.f32.xlu0 %v1103
      %v1105 = vpop.xlane.xlu0 %1104
      %v1106 = vadd.f32 %v1008, %v1010
      %1107 = vadd.xlane.f32.xlu0 %v1106
      %v1108 = vpop.xlane.xlu0 %1107
      %v1109 = vadd.f32 %v1012, %v1014
      %1110 = vadd.xlane.f32.xlu0 %v1109
      %v1111 = vpop.xlane.xlu0 %1110
      %v1112 = vadd.f32 %v1016, %v1018
      %1113 = vadd.xlane.f32.xlu0 %v1112
      %v1114 = vpop.xlane.xlu0 %1113
      %v1115 = vld [vmem:[#allocation3] sm:$0xff]
      %v1116 = vld [vmem:[#allocation3 + $0x8] sm:$0xff]
      %v1117 = vld [vmem:[#allocation3 + $0x10] sm:$0xff]
      %v1118 = vld [vmem:[#allocation3 + $0x18] sm:$0xff]
      %v1119 = vld [vmem:[#allocation3 + $0x20] sm:$0xff]
      %v1120 = vld [vmem:[#allocation3 + $0x28] sm:$0xff]
      %v1121 = vld [vmem:[#allocation3 + $0x30] sm:$0xff]
      %v1122 = vld [vmem:[#allocation3 + $0x38] sm:$0xff]
      %v1123 = vld [vmem:[#allocation3 + $0x40] sm:$0xff]
      %v1124 = vld [vmem:[#allocation3 + $0x48] sm:$0xff]
      %v1125 = vld [vmem:[#allocation3 + $0x50] sm:$0xff]
      %v1126 = vld [vmem:[#allocation3 + $0x58] sm:$0xff]
      %v1127 = vld [vmem:[#allocation3 + $0x60] sm:$0xff]
      %v1128 = vld [vmem:[#allocation3 + $0x68] sm:$0xff]
      %v1129 = vld [vmem:[#allocation3 + $0x70] sm:$0xff]
      %v1130 = vld [vmem:[#allocation3 + $0x78] sm:$0xff]
      %v1131 = vld [vmem:[#allocation3 + $0x80] sm:$0xff]
      %v1132 = vld [vmem:[#allocation3 + $0x88] sm:$0xff]
      %v1133 = vld [vmem:[#allocation3 + $0x90] sm:$0xff]
      %v1134 = vld [vmem:[#allocation3 + $0x98] sm:$0xff]
      %v1135 = vld [vmem:[#allocation3 + $0xa0] sm:$0xff]
      %v1136 = vld [vmem:[#allocation3 + $0xa8] sm:$0xff]
      %v1137 = vld [vmem:[#allocation3 + $0xb0] sm:$0xff]
      %v1138 = vld [vmem:[#allocation3 + $0xb8] sm:$0xff]
      %v1139 = vld [vmem:[#allocation3 + $0xc0] sm:$0xff]
      %v1140 = vld [vmem:[#allocation3 + $0xc8] sm:$0xff]
      %v1141 = vld [vmem:[#allocation3 + $0xd0] sm:$0xff]
      %v1142 = vld [vmem:[#allocation3 + $0xd8] sm:$0xff]
      %v1143 = vld [vmem:[#allocation3 + $0xe0] sm:$0xff]
      %v1144 = vld [vmem:[#allocation3 + $0xe8] sm:$0xff]
      %v1145 = vld [vmem:[#allocation3 + $0xf0] sm:$0xff]
      %v1146 = vld [vmem:[#allocation3 + $0xf8] sm:$0xff]
      %v1147 = vmul.f32 %v635, 1.442695
      %v1148 = vpow.pop %v1147
      %v1149 = vmul.f32 %v636, 1.442695
      %v1150 = vpow.pop %v1149
      %v1151 = vmul.f32 %v637, 1.442695
      %v1152 = vpow.pop %v1151
      %v1153 = vmul.f32 %v638, 1.442695
      %v1154 = vpow.pop %v1153
      %v1155 = vmul.f32 %v639, 1.442695
      %v1156 = vpow.pop %v1155
      %v1157 = vmul.f32 %v640, 1.442695
      %v1158 = vpow.pop %v1157
      %v1159 = vmul.f32 %v641, 1.442695
      %v1160 = vpow.pop %v1159
      %v1161 = vmul.f32 %v642, 1.442695
      %v1162 = vpow.pop %v1161
      %v1163 = vmul.f32 %v643, 1.442695
      %v1164 = vpow.pop %v1163
      %v1165 = vmul.f32 %v644, 1.442695
      %v1166 = vpow.pop %v1165
      %v1167 = vmul.f32 %v645, 1.442695
      %v1168 = vpow.pop %v1167
      %v1169 = vmul.f32 %v646, 1.442695
      %v1170 = vpow.pop %v1169
      %v1171 = vmul.f32 %v647, 1.442695
      %v1172 = vpow.pop %v1171
      %v1173 = vmul.f32 %v648, 1.442695
      %v1174 = vpow.pop %v1173
      %v1175 = vmul.f32 %v649, 1.442695
      %v1176 = vpow.pop %v1175
      %v1177 = vmul.f32 %v650, 1.442695
      %v1178 = vpow.pop %v1177
      %v1179 = vmul.f32 %v651, 1.442695
      %v1180 = vpow.pop %v1179
      %v1181 = vmul.f32 %v652, 1.442695
      %v1182 = vpow.pop %v1181
      %v1183 = vmul.f32 %v653, 1.442695
      %v1184 = vpow.pop %v1183
      %v1185 = vmul.f32 %v654, 1.442695
      %v1186 = vpow.pop %v1185
      %v1187 = vmul.f32 %v655, 1.442695
      %v1188 = vpow.pop %v1187
      %v1189 = vmul.f32 %v656, 1.442695
      %v1190 = vpow.pop %v1189
      %v1191 = vmul.f32 %v657, 1.442695
      %v1192 = vpow.pop %v1191
      %v1193 = vmul.f32 %v658, 1.442695
      %v1194 = vpow.pop %v1193
      %v1195 = vmul.f32 %v659, 1.442695
      %v1196 = vpow.pop %v1195
      %v1197 = vmul.f32 %v660, 1.442695
      %v1198 = vpow.pop %v1197
      %v1199 = vmul.f32 %v661, 1.442695
      %v1200 = vpow.pop %v1199
      %v1201 = vmul.f32 %v662, 1.442695
      %v1202 = vpow.pop %v1201
      %v1203 = vmul.f32 %v663, 1.442695
      %v1204 = vpow.pop %v1203
      %v1205 = vmul.f32 %v664, 1.442695
      %v1206 = vpow.pop %v1205
      %v1207 = vmul.f32 %v665, 1.442695
      %v1208 = vpow.pop %v1207
      %v1209 = vmul.f32 %v666, 1.442695
      %v1210 = vpow.pop %v1209
      %v1211 = vmul.f32 %v1148, %v1115
      %v1212 = vmul.f32 %v1150, %v1116
      %v1213 = vmul.f32 %v1152, %v1117
      %v1214 = vmul.f32 %v1154, %v1118
      %v1215 = vmul.f32 %v1156, %v1119
      %v1216 = vmul.f32 %v1158, %v1120
      %v1217 = vmul.f32 %v1160, %v1121
      %v1218 = vmul.f32 %v1162, %v1122
      %v1219 = vmul.f32 %v1164, %v1123
      %v1220 = vmul.f32 %v1166, %v1124
      %v1221 = vmul.f32 %v1168, %v1125
      %v1222 = vmul.f32 %v1170, %v1126
      %v1223 = vmul.f32 %v1172, %v1127
      %v1224 = vmul.f32 %v1174, %v1128
      %v1225 = vmul.f32 %v1176, %v1129
      %v1226 = vmul.f32 %v1178, %v1130
      %v1227 = vmul.f32 %v1180, %v1131
      %v1228 = vmul.f32 %v1182, %v1132
      %v1229 = vmul.f32 %v1184, %v1133
      %v1230 = vmul.f32 %v1186, %v1134
      %v1231 = vmul.f32 %v1188, %v1135
      %v1232 = vmul.f32 %v1190, %v1136
      %v1233 = vmul.f32 %v1192, %v1137
      %v1234 = vmul.f32 %v1194, %v1138
      %v1235 = vmul.f32 %v1196, %v1139
      %v1236 = vmul.f32 %v1198, %v1140
      %v1237 = vmul.f32 %v1200, %v1141
      %v1238 = vmul.f32 %v1202, %v1142
      %v1239 = vmul.f32 %v1204, %v1143
      %v1240 = vmul.f32 %v1206, %v1144
      %v1241 = vmul.f32 %v1208, %v1145
      %v1242 = vmul.f32 %v1210, %v1146
      %v1243 = vadd.f32 %v1211, %v1021
      %v1244 = vadd.f32 %v1212, %v1024
      %v1245 = vadd.f32 %v1213, %v1027
      %v1246 = vadd.f32 %v1214, %v1030
      %v1247 = vadd.f32 %v1215, %v1033
      %v1248 = vadd.f32 %v1216, %v1036
      %v1249 = vadd.f32 %v1217, %v1039
      %v1250 = vadd.f32 %v1218, %v1042
      %v1251 = vadd.f32 %v1219, %v1045
      %v1252 = vadd.f32 %v1220, %v1048
      %v1253 = vadd.f32 %v1221, %v1051
      %v1254 = vadd.f32 %v1222, %v1054
      %v1255 = vadd.f32 %v1223, %v1057
      %v1256 = vadd.f32 %v1224, %v1060
      %v1257 = vadd.f32 %v1225, %v1063
      %v1258 = vadd.f32 %v1226, %v1066
      %v1259 = vadd.f32 %v1227, %v1069
      %v1260 = vadd.f32 %v1228, %v1072
      %v1261 = vadd.f32 %v1229, %v1075
      %v1262 = vadd.f32 %v1230, %v1078
      %v1263 = vadd.f32 %v1231, %v1081
      %v1264 = vadd.f32 %v1232, %v1084
      %v1265 = vadd.f32 %v1233, %v1087
      %v1266 = vadd.f32 %v1234, %v1090
      %v1267 = vadd.f32 %v1235, %v1093
      %v1268 = vadd.f32 %v1236, %v1096
      %v1269 = vadd.f32 %v1237, %v1099
      %v1270 = vadd.f32 %v1238, %v1102
      %v1271 = vadd.f32 %v1239, %v1105
      %v1272 = vadd.f32 %v1240, %v1108
      %v1273 = vadd.f32 %v1241, %v1111
      %v1274 = vadd.f32 %v1242, %v1114
      %v1275 = vld [vmem:[%s243] sm:$0xff]
      %v1276 = vld [vmem:[%s243 + $0x8] sm:$0xff]
      %v1277 = vld [vmem:[%s243 + $0x10] sm:$0xff]
      %v1278 = vld [vmem:[%s243 + $0x18] sm:$0xff]
      %v1279 = vld [vmem:[%s243 + $0x20] sm:$0xff]
      %v1280 = vld [vmem:[%s243 + $0x28] sm:$0xff]
      %v1281 = vld [vmem:[%s243 + $0x30] sm:$0xff]
      %v1282 = vld [vmem:[%s243 + $0x38] sm:$0xff]
      %v1283 = vld [vmem:[%s243 + $0x40] sm:$0xff]
      %v1284 = vld [vmem:[%s243 + $0x48] sm:$0xff]
      %v1285 = vld [vmem:[%s243 + $0x50] sm:$0xff]
      %v1286 = vld [vmem:[%s243 + $0x58] sm:$0xff]
      %v1287 = vld [vmem:[%s243 + $0x60] sm:$0xff]
      %v1288 = vld [vmem:[%s243 + $0x68] sm:$0xff]
      %v1289 = vld [vmem:[%s243 + $0x70] sm:$0xff]
      %v1290 = vld [vmem:[%s243 + $0x78] sm:$0xff]
      %v1291 = vld [vmem:[%s243 + $0x80] sm:$0xff]
      %v1292 = vld [vmem:[%s243 + $0x88] sm:$0xff]
      %v1293 = vld [vmem:[%s243 + $0x90] sm:$0xff]
      %v1294 = vld [vmem:[%s243 + $0x98] sm:$0xff]
      %v1295 = vld [vmem:[%s243 + $0xa0] sm:$0xff]
      %v1296 = vld [vmem:[%s243 + $0xa8] sm:$0xff]
      %v1297 = vld [vmem:[%s243 + $0xb0] sm:$0xff]
      %v1298 = vld [vmem:[%s243 + $0xb8] sm:$0xff]
      %v1299 = vld [vmem:[%s243 + $0xc0] sm:$0xff]
      %v1300 = vld [vmem:[%s243 + $0xc8] sm:$0xff]
      %v1301 = vld [vmem:[%s243 + $0xd0] sm:$0xff]
      %v1302 = vld [vmem:[%s243 + $0xd8] sm:$0xff]
      %v1303 = vld [vmem:[%s243 + $0xe0] sm:$0xff]
      %v1304 = vld [vmem:[%s243 + $0xe8] sm:$0xff]
      %v1305 = vld [vmem:[%s243 + $0xf0] sm:$0xff]
      %v1306 = vld [vmem:[%s243 + $0xf8] sm:$0xff]
      %1308 = vset.pattern.permute.xlu0 0
      %1309 = vperm.xlu0 %1308, %v1211
      %v1310 = vpop.permute.xlu0 %1309
      %1313 = vset.pattern.permute.xlu0 0
      %1314 = vperm.xlu0 %1313, %v1212
      %v1315 = vpop.permute.xlu0 %1314
      %1318 = vset.pattern.permute.xlu0 0
      %1319 = vperm.xlu0 %1318, %v1213
      %v1320 = vpop.permute.xlu0 %1319
      %1323 = vset.pattern.permute.xlu0 0
      %1324 = vperm.xlu0 %1323, %v1214
      %v1325 = vpop.permute.xlu0 %1324
      %1328 = vset.pattern.permute.xlu0 0
      %1329 = vperm.xlu0 %1328, %v1215
      %v1330 = vpop.permute.xlu0 %1329
      %1333 = vset.pattern.permute.xlu0 0
      %1334 = vperm.xlu0 %1333, %v1216
      %v1335 = vpop.permute.xlu0 %1334
      %1338 = vset.pattern.permute.xlu0 0
      %1339 = vperm.xlu0 %1338, %v1217
      %v1340 = vpop.permute.xlu0 %1339
      %1343 = vset.pattern.permute.xlu0 0
      %1344 = vperm.xlu0 %1343, %v1218
      %v1345 = vpop.permute.xlu0 %1344
      %1348 = vset.pattern.permute.xlu0 0
      %1349 = vperm.xlu0 %1348, %v1219
      %v1350 = vpop.permute.xlu0 %1349
      %1353 = vset.pattern.permute.xlu0 0
      %1354 = vperm.xlu0 %1353, %v1220
      %v1355 = vpop.permute.xlu0 %1354
      %1358 = vset.pattern.permute.xlu0 0
      %1359 = vperm.xlu0 %1358, %v1221
      %v1360 = vpop.permute.xlu0 %1359
      %1363 = vset.pattern.permute.xlu0 0
      %1364 = vperm.xlu0 %1363, %v1222
      %v1365 = vpop.permute.xlu0 %1364
      %1368 = vset.pattern.permute.xlu0 0
      %1369 = vperm.xlu0 %1368, %v1223
      %v1370 = vpop.permute.xlu0 %1369
      %1373 = vset.pattern.permute.xlu0 0
      %1374 = vperm.xlu0 %1373, %v1224
      %v1375 = vpop.permute.xlu0 %1374
      %1378 = vset.pattern.permute.xlu0 0
      %1379 = vperm.xlu0 %1378, %v1225
      %v1380 = vpop.permute.xlu0 %1379
      %1383 = vset.pattern.permute.xlu0 0
      %1384 = vperm.xlu0 %1383, %v1226
      %v1385 = vpop.permute.xlu0 %1384
      %1388 = vset.pattern.permute.xlu0 0
      %1389 = vperm.xlu0 %1388, %v1227
      %v1390 = vpop.permute.xlu0 %1389
      %1393 = vset.pattern.permute.xlu0 0
      %1394 = vperm.xlu0 %1393, %v1228
      %v1395 = vpop.permute.xlu0 %1394
      %1398 = vset.pattern.permute.xlu0 0
      %1399 = vperm.xlu0 %1398, %v1229
      %v1400 = vpop.permute.xlu0 %1399
      %1403 = vset.pattern.permute.xlu0 0
      %1404 = vperm.xlu0 %1403, %v1230
      %v1405 = vpop.permute.xlu0 %1404
      %1408 = vset.pattern.permute.xlu0 0
      %1409 = vperm.xlu0 %1408, %v1231
      %v1410 = vpop.permute.xlu0 %1409
      %1413 = vset.pattern.permute.xlu0 0
      %1414 = vperm.xlu0 %1413, %v1232
      %v1415 = vpop.permute.xlu0 %1414
      %1418 = vset.pattern.permute.xlu0 0
      %1419 = vperm.xlu0 %1418, %v1233
      %v1420 = vpop.permute.xlu0 %1419
      %1423 = vset.pattern.permute.xlu0 0
      %1424 = vperm.xlu0 %1423, %v1234
      %v1425 = vpop.permute.xlu0 %1424
      %1428 = vset.pattern.permute.xlu0 0
      %1429 = vperm.xlu0 %1428, %v1235
      %v1430 = vpop.permute.xlu0 %1429
      %1433 = vset.pattern.permute.xlu0 0
      %1434 = vperm.xlu0 %1433, %v1236
      %v1435 = vpop.permute.xlu0 %1434
      %1438 = vset.pattern.permute.xlu0 0
      %1439 = vperm.xlu0 %1438, %v1237
      %v1440 = vpop.permute.xlu0 %1439
      %1443 = vset.pattern.permute.xlu0 0
      %1444 = vperm.xlu0 %1443, %v1238
      %v1445 = vpop.permute.xlu0 %1444
      %1448 = vset.pattern.permute.xlu0 0
      %1449 = vperm.xlu0 %1448, %v1239
      %v1450 = vpop.permute.xlu0 %1449
      %1453 = vset.pattern.permute.xlu0 0
      %1454 = vperm.xlu0 %1453, %v1240
      %v1455 = vpop.permute.xlu0 %1454
      %1458 = vset.pattern.permute.xlu0 0
      %1459 = vperm.xlu0 %1458, %v1241
      %v1460 = vpop.permute.xlu0 %1459
      %1463 = vset.pattern.permute.xlu0 0
      %1464 = vperm.xlu0 %1463, %v1242
      %v1465 = vpop.permute.xlu0 %1464
      %v1467 = vmul.f32 %v1310, %v1275
      %v1468 = vmul.f32 %v1315, %v1276
      %v1469 = vmul.f32 %v1320, %v1277
      %v1470 = vmul.f32 %v1325, %v1278
      %v1471 = vmul.f32 %v1330, %v1279
      %v1472 = vmul.f32 %v1335, %v1280
      %v1473 = vmul.f32 %v1340, %v1281
      %v1474 = vmul.f32 %v1345, %v1282
      %v1475 = vmul.f32 %v1350, %v1283
      %v1476 = vmul.f32 %v1355, %v1284
      %v1477 = vmul.f32 %v1360, %v1285
      %v1478 = vmul.f32 %v1365, %v1286
      %v1479 = vmul.f32 %v1370, %v1287
      %v1480 = vmul.f32 %v1375, %v1288
      %v1481 = vmul.f32 %v1380, %v1289
      %v1482 = vmul.f32 %v1385, %v1290
      %v1483 = vmul.f32 %v1390, %v1291
      %v1484 = vmul.f32 %v1395, %v1292
      %v1485 = vmul.f32 %v1400, %v1293
      %v1486 = vmul.f32 %v1405, %v1294
      %v1487 = vmul.f32 %v1410, %v1295
      %v1488 = vmul.f32 %v1415, %v1296
      %v1489 = vmul.f32 %v1420, %v1297
      %v1490 = vmul.f32 %v1425, %v1298
      %v1491 = vmul.f32 %v1430, %v1299
      %v1492 = vmul.f32 %v1435, %v1300
      %v1493 = vmul.f32 %v1440, %v1301
      %v1494 = vmul.f32 %v1445, %v1302
      %v1495 = vmul.f32 %v1450, %v1303
      %v1496 = vmul.f32 %v1455, %v1304
      %v1497 = vmul.f32 %v1460, %v1305
      %v1498 = vmul.f32 %v1465, %v1306
      %v1499 = vld [vmem:[%s233] sm:$0xff]
      %v1500 = vld [vmem:[%s233 + $0x8] sm:$0xff]
      %v1501 = vld [vmem:[%s233 + $0x10] sm:$0xff]
      %v1502 = vld [vmem:[%s233 + $0x18] sm:$0xff]
      %v1503 = vld [vmem:[%s233 + $0x20] sm:$0xff]
      %v1504 = vld [vmem:[%s233 + $0x28] sm:$0xff]
      %v1505 = vld [vmem:[%s233 + $0x30] sm:$0xff]
      %v1506 = vld [vmem:[%s233 + $0x38] sm:$0xff]
      %v1507 = vld [vmem:[%s233 + $0x40] sm:$0xff]
      %v1508 = vld [vmem:[%s233 + $0x48] sm:$0xff]
      %v1509 = vld [vmem:[%s233 + $0x50] sm:$0xff]
      %v1510 = vld [vmem:[%s233 + $0x58] sm:$0xff]
      %v1511 = vld [vmem:[%s233 + $0x60] sm:$0xff]
      %v1512 = vld [vmem:[%s233 + $0x68] sm:$0xff]
      %v1513 = vld [vmem:[%s233 + $0x70] sm:$0xff]
      %v1514 = vld [vmem:[%s233 + $0x78] sm:$0xff]
      %v1515 = vld [vmem:[%s233 + $0x80] sm:$0xff]
      %v1516 = vld [vmem:[%s233 + $0x88] sm:$0xff]
      %v1517 = vld [vmem:[%s233 + $0x90] sm:$0xff]
      %v1518 = vld [vmem:[%s233 + $0x98] sm:$0xff]
      %v1519 = vld [vmem:[%s233 + $0xa0] sm:$0xff]
      %v1520 = vld [vmem:[%s233 + $0xa8] sm:$0xff]
      %v1521 = vld [vmem:[%s233 + $0xb0] sm:$0xff]
      %v1522 = vld [vmem:[%s233 + $0xb8] sm:$0xff]
      %v1523 = vld [vmem:[%s233 + $0xc0] sm:$0xff]
      %v1524 = vld [vmem:[%s233 + $0xc8] sm:$0xff]
      %v1525 = vld [vmem:[%s233 + $0xd0] sm:$0xff]
      %v1526 = vld [vmem:[%s233 + $0xd8] sm:$0xff]
      %v1527 = vld [vmem:[%s233 + $0xe0] sm:$0xff]
      %v1528 = vld [vmem:[%s233 + $0xe8] sm:$0xff]
      %v1529 = vld [vmem:[%s233 + $0xf0] sm:$0xff]
      %v1530 = vld [vmem:[%s233 + $0xf8] sm:$0xff]
      %1531 = vmatprep.subr.mxu0 0.0
      %1532 = vmatpush1.msra.mxu0 %v1499
      %1533 = vmatprep.subr.mxu0 0.0
      %1534 = vmatpush1.msra.mxu0 %v1500
      %1535 = vmatprep.subr.mxu0 0.0
      %1536 = vmatpush1.msra.mxu0 %v1501
      %1537 = vmatprep.subr.mxu0 0.0
      %1538 = vmatpush1.msra.mxu0 %v1502
      %1539 = vmatprep.subr.mxu0 0.0
      %1540 = vmatpush1.msra.mxu0 %v1503
      %1541 = vmatprep.subr.mxu0 0.0
      %1542 = vmatpush1.msra.mxu0 %v1504
      %1543 = vmatprep.subr.mxu0 0.0
      %1544 = vmatpush1.msra.mxu0 %v1505
      %1545 = vmatprep.subr.mxu0 0.0
      %1546 = vmatpush1.msra.mxu0 %v1506
      %1547 = vmatprep.subr.mxu0 0.0
      %1548 = vmatpush1.msra.mxu0 %v1507
      %1549 = vmatprep.subr.mxu0 0.0
      %1550 = vmatpush1.msra.mxu0 %v1508
      %1551 = vmatprep.subr.mxu0 0.0
      %1552 = vmatpush1.msra.mxu0 %v1509
      %1553 = vmatprep.subr.mxu0 0.0
      %1554 = vmatpush1.msra.mxu0 %v1510
      %1555 = vmatprep.subr.mxu0 0.0
      %1556 = vmatpush1.msra.mxu0 %v1511
      %1557 = vmatprep.subr.mxu0 0.0
      %1558 = vmatpush1.msra.mxu0 %v1512
      %1559 = vmatprep.subr.mxu0 0.0
      %1560 = vmatpush1.msra.mxu0 %v1513
      %1561 = vmatprep.subr.mxu0 0.0
      %1562 = vmatpush1.msra.mxu0 %v1514
      %1563 = vmatprep.subr.mxu0 0.0
      %1564 = vmatpush1.msra.mxu0 %v1515
      %1565 = vmatprep.subr.mxu0 0.0
      %1566 = vmatpush1.msra.mxu0 %v1516
      %1567 = vmatprep.subr.mxu0 0.0
      %1568 = vmatpush1.msra.mxu0 %v1517
      %1569 = vmatprep.subr.mxu0 0.0
      %1570 = vmatpush1.msra.mxu0 %v1518
      %1571 = vmatprep.subr.mxu0 0.0
      %1572 = vmatpush1.msra.mxu0 %v1519
      %1573 = vmatprep.subr.mxu0 0.0
      %1574 = vmatpush1.msra.mxu0 %v1520
      %1575 = vmatprep.subr.mxu0 0.0
      %1576 = vmatpush1.msra.mxu0 %v1521
      %1577 = vmatprep.subr.mxu0 0.0
      %1578 = vmatpush1.msra.mxu0 %v1522
      %1579 = vmatprep.subr.mxu0 0.0
      %1580 = vmatpush1.msra.mxu0 %v1523
      %1581 = vmatprep.subr.mxu0 0.0
      %1582 = vmatpush1.msra.mxu0 %v1524
      %1583 = vmatprep.subr.mxu0 0.0
      %1584 = vmatpush1.msra.mxu0 %v1525
      %1585 = vmatprep.subr.mxu0 0.0
      %1586 = vmatpush1.msra.mxu0 %v1526
      %1587 = vmatprep.subr.mxu0 0.0
      %1588 = vmatpush1.msra.mxu0 %v1527
      %1589 = vmatprep.subr.mxu0 0.0
      %1590 = vmatpush1.msra.mxu0 %v1528
      %1591 = vmatprep.subr.mxu0 0.0
      %1592 = vmatpush1.msra.mxu0 %v1529
      %1593 = vmatprep.subr.mxu0 0.0
      %1594 = vmatpush1.msra.mxu0 %v1530
      %1595 = vmatprep.mubr.f32.mxu0 %v894
      %1596 = vmatmul.mubr.f32.gmra.mrb[0].mxu0 %v892
      %v1597 = vpop.f32.mrb[0].mxu0
      %v1598 = vadd.f32 %v1467, %v1597
      %v1599 = vpop.f32.mrb[0].mxu0
      %1600 = vmatprep.mubr.f32.mxu0 %v898
      %1601 = vmatmul.mubr.f32.gmra.mrb[0].mxu0 %v896
      %v1602 = vpop.f32.mrb[0].mxu0
      %v1603 = vadd.f32 %v1468, %v1602
      %v1604 = vpop.f32.mrb[0].mxu0
      %1605 = vmatprep.mubr.f32.mxu0 %v902
      %1606 = vmatmul.mubr.f32.gmra.mrb[0].mxu0 %v900
      %v1607 = vpop.f32.mrb[0].mxu0
      %v1608 = vadd.f32 %v1469, %v1607
      %v1609 = vpop.f32.mrb[0].mxu0
      %1610 = vmatprep.mubr.f32.mxu0 %v906
      %1611 = vmatmul.mubr.f32.gmra.mrb[0].mxu0 %v904
      %v1612 = vpop.f32.mrb[0].mxu0
      %v1613 = vadd.f32 %v1470, %v1612
      %v1614 = vpop.f32.mrb[0].mxu0
      %1615 = vmatprep.mubr.f32.mxu0 %v910
      %1616 = vmatmul.mubr.f32.gmra.mrb[0].mxu0 %v908
      %v1617 = vpop.f32.mrb[0].mxu0
      %v1618 = vadd.f32 %v1471, %v1617
      %v1619 = vpop.f32.mrb[0].mxu0
      %1620 = vmatprep.mubr.f32.mxu0 %v914
      %1621 = vmatmul.mubr.f32.gmra.mrb[0].mxu0 %v912
      %v1622 = vpop.f32.mrb[0].mxu0
      %v1623 = vadd.f32 %v1472, %v1622
      %v1624 = vpop.f32.mrb[0].mxu0
      %1625 = vmatprep.mubr.f32.mxu0 %v918
      %1626 = vmatmul.mubr.f32.gmra.mrb[0].mxu0 %v916
      %v1627 = vpop.f32.mrb[0].mxu0
      %v1628 = vadd.f32 %v1473, %v1627
      %v1629 = vpop.f32.mrb[0].mxu0
      %1630 = vmatprep.mubr.f32.mxu0 %v922
      %1631 = vmatmul.mubr.f32.gmra.mrb[0].mxu0 %v920
      %v1632 = vpop.f32.mrb[0].mxu0
      %v1633 = vadd.f32 %v1474, %v1632
      %v1634 = vpop.f32.mrb[0].mxu0
      %1635 = vmatprep.mubr.f32.mxu0 %v926
      %1636 = vmatmul.mubr.f32.gmra.mrb[0].mxu0 %v924
      %v1637 = vpop.f32.mrb[0].mxu0
      %v1638 = vadd.f32 %v1475, %v1637
      %v1639 = vpop.f32.mrb[0].mxu0
      %1640 = vmatprep.mubr.f32.mxu0 %v930
      %1641 = vmatmul.mubr.f32.gmra.mrb[0].mxu0 %v928
      %v1642 = vpop.f32.mrb[0].mxu0
      %v1643 = vadd.f32 %v1476, %v1642
      %v1644 = vpop.f32.mrb[0].mxu0
      %1645 = vmatprep.mubr.f32.mxu0 %v934
      %1646 = vmatmul.mubr.f32.gmra.mrb[0].mxu0 %v932
      %v1647 = vpop.f32.mrb[0].mxu0
      %v1648 = vadd.f32 %v1477, %v1647
      %v1649 = vpop.f32.mrb[0].mxu0
      %1650 = vmatprep.mubr.f32.mxu0 %v938
      %1651 = vmatmul.mubr.f32.gmra.mrb[0].mxu0 %v936
      %v1652 = vpop.f32.mrb[0].mxu0
      %v1653 = vadd.f32 %v1478, %v1652
      %v1654 = vpop.f32.mrb[0].mxu0
      %1655 = vmatprep.mubr.f32.mxu0 %v942
      %1656 = vmatmul.mubr.f32.gmra.mrb[0].mxu0 %v940
      %v1657 = vpop.f32.mrb[0].mxu0
      %v1658 = vadd.f32 %v1479, %v1657
      %v1659 = vpop.f32.mrb[0].mxu0
      %1660 = vmatprep.mubr.f32.mxu0 %v946
      %1661 = vmatmul.mubr.f32.gmra.mrb[0].mxu0 %v944
      %v1662 = vpop.f32.mrb[0].mxu0
      %v1663 = vadd.f32 %v1480, %v1662
      %v1664 = vpop.f32.mrb[0].mxu0
      %1665 = vmatprep.mubr.f32.mxu0 %v950
      %1666 = vmatmul.mubr.f32.gmra.mrb[0].mxu0 %v948
      %v1667 = vpop.f32.mrb[0].mxu0
      %v1668 = vadd.f32 %v1481, %v1667
      %v1669 = vpop.f32.mrb[0].mxu0
      %1670 = vmatprep.mubr.f32.mxu0 %v954
      %1671 = vmatmul.mubr.f32.gmra.mrb[0].mxu0 %v952
      %v1672 = vpop.f32.mrb[0].mxu0
      %v1673 = vadd.f32 %v1482, %v1672
      %v1674 = vpop.f32.mrb[0].mxu0
      %1675 = vmatprep.mubr.f32.mxu0 %v958
      %1676 = vmatmul.mubr.f32.gmra.mrb[0].mxu0 %v956
      %v1677 = vpop.f32.mrb[0].mxu0
      %v1678 = vadd.f32 %v1483, %v1677
      %v1679 = vpop.f32.mrb[0].mxu0
      %1680 = vmatprep.mubr.f32.mxu0 %v962
      %1681 = vmatmul.mubr.f32.gmra.mrb[0].mxu0 %v960
      %v1682 = vpop.f32.mrb[0].mxu0
      %v1683 = vadd.f32 %v1484, %v1682
      %v1684 = vpop.f32.mrb[0].mxu0
      %1685 = vmatprep.mubr.f32.mxu0 %v966
      %1686 = vmatmul.mubr.f32.gmra.mrb[0].mxu0 %v964
      %v1687 = vpop.f32.mrb[0].mxu0
      %v1688 = vadd.f32 %v1485, %v1687
      %v1689 = vpop.f32.mrb[0].mxu0
      %1690 = vmatprep.mubr.f32.mxu0 %v970
      %1691 = vmatmul.mubr.f32.gmra.mrb[0].mxu0 %v968
      %v1692 = vpop.f32.mrb[0].mxu0
      %v1693 = vadd.f32 %v1486, %v1692
      %v1694 = vpop.f32.mrb[0].mxu0
      %1695 = vmatprep.mubr.f32.mxu0 %v974
      %1696 = vmatmul.mubr.f32.gmra.mrb[0].mxu0 %v972
      %v1697 = vpop.f32.mrb[0].mxu0
      %v1698 = vadd.f32 %v1487, %v1697
      %v1699 = vpop.f32.mrb[0].mxu0
      %1700 = vmatprep.mubr.f32.mxu0 %v978
      %1701 = vmatmul.mubr.f32.gmra.mrb[0].mxu0 %v976
      %v1702 = vpop.f32.mrb[0].mxu0
      %v1703 = vadd.f32 %v1488, %v1702
      %v1704 = vpop.f32.mrb[0].mxu0
      %1705 = vmatprep.mubr.f32.mxu0 %v982
      %1706 = vmatmul.mubr.f32.gmra.mrb[0].mxu0 %v980
      %v1707 = vpop.f32.mrb[0].mxu0
      %v1708 = vadd.f32 %v1489, %v1707
      %v1709 = vpop.f32.mrb[0].mxu0
      %1710 = vmatprep.mubr.f32.mxu0 %v986
      %1711 = vmatmul.mubr.f32.gmra.mrb[0].mxu0 %v984
      %v1712 = vpop.f32.mrb[0].mxu0
      %v1713 = vadd.f32 %v1490, %v1712
      %v1714 = vpop.f32.mrb[0].mxu0
      %1715 = vmatprep.mubr.f32.mxu0 %v990
      %1716 = vmatmul.mubr.f32.gmra.mrb[0].mxu0 %v988
      %v1717 = vpop.f32.mrb[0].mxu0
      %v1718 = vadd.f32 %v1491, %v1717
      %v1719 = vpop.f32.mrb[0].mxu0
      %1720 = vmatprep.mubr.f32.mxu0 %v994
      %1721 = vmatmul.mubr.f32.gmra.mrb[0].mxu0 %v992
      %v1722 = vpop.f32.mrb[0].mxu0
      %v1723 = vadd.f32 %v1492, %v1722
      %v1724 = vpop.f32.mrb[0].mxu0
      %1725 = vmatprep.mubr.f32.mxu0 %v998
      %1726 = vmatmul.mubr.f32.gmra.mrb[0].mxu0 %v996
      %v1727 = vpop.f32.mrb[0].mxu0
      %v1728 = vadd.f32 %v1493, %v1727
      %v1729 = vpop.f32.mrb[0].mxu0
      %1730 = vmatprep.mubr.f32.mxu0 %v1002
      %1731 = vmatmul.mubr.f32.gmra.mrb[0].mxu0 %v1000
      %v1732 = vpop.f32.mrb[0].mxu0
      %v1733 = vadd.f32 %v1494, %v1732
      %v1734 = vpop.f32.mrb[0].mxu0
      %1735 = vmatprep.mubr.f32.mxu0 %v1006
      %1736 = vmatmul.mubr.f32.gmra.mrb[0].mxu0 %v1004
      %v1737 = vpop.f32.mrb[0].mxu0
      %v1738 = vadd.f32 %v1495, %v1737
      %v1739 = vpop.f32.mrb[0].mxu0
      %1740 = vmatprep.mubr.f32.mxu0 %v1010
      %1741 = vmatmul.mubr.f32.gmra.mrb[0].mxu0 %v1008
      %v1742 = vpop.f32.mrb[0].mxu0
      %v1743 = vadd.f32 %v1496, %v1742
      %v1744 = vpop.f32.mrb[0].mxu0
      %1745 = vmatprep.mubr.f32.mxu0 %v1014
      %1746 = vmatmul.mubr.f32.gmra.mrb[0].mxu0 %v1012
      %v1747 = vpop.f32.mrb[0].mxu0
      %v1748 = vadd.f32 %v1497, %v1747
      %v1749 = vpop.f32.mrb[0].mxu0
      %1750 = vmatprep.mubr.f32.mxu0 %v1018
      %1751 = vmatmul.mubr.f32.gmra.mrb[0].mxu0 %v1016
      %v1752 = vpop.f32.mrb[0].mxu0
      %v1753 = vadd.f32 %v1498, %v1752
      %v1754 = vpop.f32.mrb[0].mxu0
      %1755 = vdwg.mxu0
      %v1756 = vrcp.pop %v1243
      %v1757 = vmul.f32 1.0, %v1756
      %v1758 = vrcp.pop %v1244
      %v1759 = vmul.f32 1.0, %v1758
      %v1760 = vrcp.pop %v1245
      %v1761 = vmul.f32 1.0, %v1760
      %v1762 = vrcp.pop %v1246
      %v1763 = vmul.f32 1.0, %v1762
      %v1764 = vrcp.pop %v1247
      %v1765 = vmul.f32 1.0, %v1764
      %v1766 = vrcp.pop %v1248
      %v1767 = vmul.f32 1.0, %v1766
      %v1768 = vrcp.pop %v1249
      %v1769 = vmul.f32 1.0, %v1768
      %v1770 = vrcp.pop %v1250
      %v1771 = vmul.f32 1.0, %v1770
      %v1772 = vrcp.pop %v1251
      %v1773 = vmul.f32 1.0, %v1772
      %v1774 = vrcp.pop %v1252
      %v1775 = vmul.f32 1.0, %v1774
      %v1776 = vrcp.pop %v1253
      %v1777 = vmul.f32 1.0, %v1776
      %v1778 = vrcp.pop %v1254
      %v1779 = vmul.f32 1.0, %v1778
      %v1780 = vrcp.pop %v1255
      %v1781 = vmul.f32 1.0, %v1780
      %v1782 = vrcp.pop %v1256
      %v1783 = vmul.f32 1.0, %v1782
      %v1784 = vrcp.pop %v1257
      %v1785 = vmul.f32 1.0, %v1784
      %v1786 = vrcp.pop %v1258
      %v1787 = vmul.f32 1.0, %v1786
      %v1788 = vrcp.pop %v1259
      %v1789 = vmul.f32 1.0, %v1788
      %v1790 = vrcp.pop %v1260
      %v1791 = vmul.f32 1.0, %v1790
      %v1792 = vrcp.pop %v1261
      %v1793 = vmul.f32 1.0, %v1792
      %v1794 = vrcp.pop %v1262
      %v1795 = vmul.f32 1.0, %v1794
      %v1796 = vrcp.pop %v1263
      %v1797 = vmul.f32 1.0, %v1796
      %v1798 = vrcp.pop %v1264
      %v1799 = vmul.f32 1.0, %v1798
      %v1800 = vrcp.pop %v1265
      %v1801 = vmul.f32 1.0, %v1800
      %v1802 = vrcp.pop %v1266
      %v1803 = vmul.f32 1.0, %v1802
      %v1804 = vrcp.pop %v1267
      %v1805 = vmul.f32 1.0, %v1804
      %v1806 = vrcp.pop %v1268
      %v1807 = vmul.f32 1.0, %v1806
      %v1808 = vrcp.pop %v1269
      %v1809 = vmul.f32 1.0, %v1808
      %v1810 = vrcp.pop %v1270
      %v1811 = vmul.f32 1.0, %v1810
      %v1812 = vrcp.pop %v1271
      %v1813 = vmul.f32 1.0, %v1812
      %v1814 = vrcp.pop %v1272
      %v1815 = vmul.f32 1.0, %v1814
      %v1816 = vrcp.pop %v1273
      %v1817 = vmul.f32 1.0, %v1816
      %v1818 = vrcp.pop %v1274
      %v1819 = vmul.f32 1.0, %v1818
      %1821 = vset.pattern.permute.xlu0 0
      %1822 = vperm.xlu0 %1821, %v1757
      %v1823 = vpop.permute.xlu0 %1822
      %1826 = vset.pattern.permute.xlu0 0
      %1827 = vperm.xlu0 %1826, %v1759
      %v1828 = vpop.permute.xlu0 %1827
      %1831 = vset.pattern.permute.xlu0 0
      %1832 = vperm.xlu0 %1831, %v1761
      %v1833 = vpop.permute.xlu0 %1832
      %1836 = vset.pattern.permute.xlu0 0
      %1837 = vperm.xlu0 %1836, %v1763
      %v1838 = vpop.permute.xlu0 %1837
      %1841 = vset.pattern.permute.xlu0 0
      %1842 = vperm.xlu0 %1841, %v1765
      %v1843 = vpop.permute.xlu0 %1842
      %1846 = vset.pattern.permute.xlu0 0
      %1847 = vperm.xlu0 %1846, %v1767
      %v1848 = vpop.permute.xlu0 %1847
      %1851 = vset.pattern.permute.xlu0 0
      %1852 = vperm.xlu0 %1851, %v1769
      %v1853 = vpop.permute.xlu0 %1852
      %1856 = vset.pattern.permute.xlu0 0
      %1857 = vperm.xlu0 %1856, %v1771
      %v1858 = vpop.permute.xlu0 %1857
      %1861 = vset.pattern.permute.xlu0 0
      %1862 = vperm.xlu0 %1861, %v1773
      %v1863 = vpop.permute.xlu0 %1862
      %1866 = vset.pattern.permute.xlu0 0
      %1867 = vperm.xlu0 %1866, %v1775
      %v1868 = vpop.permute.xlu0 %1867
      %1871 = vset.pattern.permute.xlu0 0
      %1872 = vperm.xlu0 %1871, %v1777
      %v1873 = vpop.permute.xlu0 %1872
      %1876 = vset.pattern.permute.xlu0 0
      %1877 = vperm.xlu0 %1876, %v1779
      %v1878 = vpop.permute.xlu0 %1877
      %1881 = vset.pattern.permute.xlu0 0
      %1882 = vperm.xlu0 %1881, %v1781
      %v1883 = vpop.permute.xlu0 %1882
      %1886 = vset.pattern.permute.xlu0 0
      %1887 = vperm.xlu0 %1886, %v1783
      %v1888 = vpop.permute.xlu0 %1887
      %1891 = vset.pattern.permute.xlu0 0
      %1892 = vperm.xlu0 %1891, %v1785
      %v1893 = vpop.permute.xlu0 %1892
      %1896 = vset.pattern.permute.xlu0 0
      %1897 = vperm.xlu0 %1896, %v1787
      %v1898 = vpop.permute.xlu0 %1897
      %1901 = vset.pattern.permute.xlu0 0
      %1902 = vperm.xlu0 %1901, %v1789
      %v1903 = vpop.permute.xlu0 %1902
      %1906 = vset.pattern.permute.xlu0 0
      %1907 = vperm.xlu0 %1906, %v1791
      %v1908 = vpop.permute.xlu0 %1907
      %1911 = vset.pattern.permute.xlu0 0
      %1912 = vperm.xlu0 %1911, %v1793
      %v1913 = vpop.permute.xlu0 %1912
      %1916 = vset.pattern.permute.xlu0 0
      %1917 = vperm.xlu0 %1916, %v1795
      %v1918 = vpop.permute.xlu0 %1917
      %1921 = vset.pattern.permute.xlu0 0
      %1922 = vperm.xlu0 %1921, %v1797
      %v1923 = vpop.permute.xlu0 %1922
      %1926 = vset.pattern.permute.xlu0 0
      %1927 = vperm.xlu0 %1926, %v1799
      %v1928 = vpop.permute.xlu0 %1927
      %1931 = vset.pattern.permute.xlu0 0
      %1932 = vperm.xlu0 %1931, %v1801
      %v1933 = vpop.permute.xlu0 %1932
      %1936 = vset.pattern.permute.xlu0 0
      %1937 = vperm.xlu0 %1936, %v1803
      %v1938 = vpop.permute.xlu0 %1937
      %1941 = vset.pattern.permute.xlu0 0
      %1942 = vperm.xlu0 %1941, %v1805
      %v1943 = vpop.permute.xlu0 %1942
      %1946 = vset.pattern.permute.xlu0 0
      %1947 = vperm.xlu0 %1946, %v1807
      %v1948 = vpop.permute.xlu0 %1947
      %1951 = vset.pattern.permute.xlu0 0
      %1952 = vperm.xlu0 %1951, %v1809
      %v1953 = vpop.permute.xlu0 %1952
      %1956 = vset.pattern.permute.xlu0 0
      %1957 = vperm.xlu0 %1956, %v1811
      %v1958 = vpop.permute.xlu0 %1957
      %1961 = vset.pattern.permute.xlu0 0
      %1962 = vperm.xlu0 %1961, %v1813
      %v1963 = vpop.permute.xlu0 %1962
      %1966 = vset.pattern.permute.xlu0 0
      %1967 = vperm.xlu0 %1966, %v1815
      %v1968 = vpop.permute.xlu0 %1967
      %1971 = vset.pattern.permute.xlu0 0
      %1972 = vperm.xlu0 %1971, %v1817
      %v1973 = vpop.permute.xlu0 %1972
      %1976 = vset.pattern.permute.xlu0 0
      %1977 = vperm.xlu0 %1976, %v1819
      %v1978 = vpop.permute.xlu0 %1977
      %v1980 = vmul.f32 %v1598, %v1823
      %v1981 = vmul.f32 %v1603, %v1828
      %v1982 = vmul.f32 %v1608, %v1833
      %v1983 = vmul.f32 %v1613, %v1838
      %v1984 = vmul.f32 %v1618, %v1843
      %v1985 = vmul.f32 %v1623, %v1848
      %v1986 = vmul.f32 %v1628, %v1853
      %v1987 = vmul.f32 %v1633, %v1858
      %v1988 = vmul.f32 %v1638, %v1863
      %v1989 = vmul.f32 %v1643, %v1868
      %v1990 = vmul.f32 %v1648, %v1873
      %v1991 = vmul.f32 %v1653, %v1878
      %v1992 = vmul.f32 %v1658, %v1883
      %v1993 = vmul.f32 %v1663, %v1888
      %v1994 = vmul.f32 %v1668, %v1893
      %v1995 = vmul.f32 %v1673, %v1898
      %v1996 = vmul.f32 %v1678, %v1903
      %v1997 = vmul.f32 %v1683, %v1908
      %v1998 = vmul.f32 %v1688, %v1913
      %v1999 = vmul.f32 %v1693, %v1918
      %v2000 = vmul.f32 %v1698, %v1923
      %v2001 = vmul.f32 %v1703, %v1928
      %v2002 = vmul.f32 %v1708, %v1933
      %v2003 = vmul.f32 %v1713, %v1938
      %v2004 = vmul.f32 %v1718, %v1943
      %v2005 = vmul.f32 %v1723, %v1948
      %v2006 = vmul.f32 %v1728, %v1953
      %v2007 = vmul.f32 %v1733, %v1958
      %v2008 = vmul.f32 %v1738, %v1963
      %v2009 = vmul.f32 %v1743, %v1968
      %v2010 = vmul.f32 %v1748, %v1973
      %v2011 = vmul.f32 %v1753, %v1978
      %vm2012 = vcmask 261120
      %2013 = vst.msk [vmem:[%s243] sm:$0xff] %vm2012, %v1980
      %2014 = vst.msk [vmem:[%s243 + $0x8] sm:$0xff] %vm2012, %v1981
      %2015 = vst.msk [vmem:[%s243 + $0x10] sm:$0xff] %vm2012, %v1982
      %2016 = vst.msk [vmem:[%s243 + $0x18] sm:$0xff] %vm2012, %v1983
      %2017 = vst.msk [vmem:[%s243 + $0x20] sm:$0xff] %vm2012, %v1984
      %2018 = vst.msk [vmem:[%s243 + $0x28] sm:$0xff] %vm2012, %v1985
      %2019 = vst.msk [vmem:[%s243 + $0x30] sm:$0xff] %vm2012, %v1986
      %2020 = vst.msk [vmem:[%s243 + $0x38] sm:$0xff] %vm2012, %v1987
      %2021 = vst.msk [vmem:[%s243 + $0x40] sm:$0xff] %vm2012, %v1988
      %2022 = vst.msk [vmem:[%s243 + $0x48] sm:$0xff] %vm2012, %v1989
      %2023 = vst.msk [vmem:[%s243 + $0x50] sm:$0xff] %vm2012, %v1990
      %2024 = vst.msk [vmem:[%s243 + $0x58] sm:$0xff] %vm2012, %v1991
      %2025 = vst.msk [vmem:[%s243 + $0x60] sm:$0xff] %vm2012, %v1992
      %2026 = vst.msk [vmem:[%s243 + $0x68] sm:$0xff] %vm2012, %v1993
      %2027 = vst.msk [vmem:[%s243 + $0x70] sm:$0xff] %vm2012, %v1994
      %2028 = vst.msk [vmem:[%s243 + $0x78] sm:$0xff] %vm2012, %v1995
      %2029 = vst.msk [vmem:[%s243 + $0x80] sm:$0xff] %vm2012, %v1996
      %2030 = vst.msk [vmem:[%s243 + $0x88] sm:$0xff] %vm2012, %v1997
      %2031 = vst.msk [vmem:[%s243 + $0x90] sm:$0xff] %vm2012, %v1998
      %2032 = vst.msk [vmem:[%s243 + $0x98] sm:$0xff] %vm2012, %v1999
      %2033 = vst.msk [vmem:[%s243 + $0xa0] sm:$0xff] %vm2012, %v2000
      %2034 = vst.msk [vmem:[%s243 + $0xa8] sm:$0xff] %vm2012, %v2001
      %2035 = vst.msk [vmem:[%s243 + $0xb0] sm:$0xff] %vm2012, %v2002
      %2036 = vst.msk [vmem:[%s243 + $0xb8] sm:$0xff] %vm2012, %v2003
      %2037 = vst.msk [vmem:[%s243 + $0xc0] sm:$0xff] %vm2012, %v2004
      %2038 = vst.msk [vmem:[%s243 + $0xc8] sm:$0xff] %vm2012, %v2005
      %2039 = vst.msk [vmem:[%s243 + $0xd0] sm:$0xff] %vm2012, %v2006
      %2040 = vst.msk [vmem:[%s243 + $0xd8] sm:$0xff] %vm2012, %v2007
      %2041 = vst.msk [vmem:[%s243 + $0xe0] sm:$0xff] %vm2012, %v2008
      %2042 = vst.msk [vmem:[%s243 + $0xe8] sm:$0xff] %vm2012, %v2009
      %2043 = vst.msk [vmem:[%s243 + $0xf0] sm:$0xff] %vm2012, %v2010
      %2044 = vst.msk [vmem:[%s243 + $0xf8] sm:$0xff] %vm2012, %v2011
      %vm2045 = vcmask 7168
      %2046 = vst.msk [vmem:[#allocation2] sm:$0xff] %vm2045, %v539
      %2047 = vst.msk [vmem:[#allocation2 + $0x8] sm:$0xff] %vm2045, %v540
      %2048 = vst.msk [vmem:[#allocation2 + $0x10] sm:$0xff] %vm2045, %v541
      %2049 = vst.msk [vmem:[#allocation2 + $0x18] sm:$0xff] %vm2045, %v542
      %2050 = vst.msk [vmem:[#allocation2 + $0x20] sm:$0xff] %vm2045, %v543
      %2051 = vst.msk [vmem:[#allocation2 + $0x28] sm:$0xff] %vm2045, %v544
      %2052 = vst.msk [vmem:[#allocation2 + $0x30] sm:$0xff] %vm2045, %v545
      %2053 = vst.msk [vmem:[#allocation2 + $0x38] sm:$0xff] %vm2045, %v546
      %2054 = vst.msk [vmem:[#allocation2 + $0x40] sm:$0xff] %vm2045, %v547
      %2055 = vst.msk [vmem:[#allocation2 + $0x48] sm:$0xff] %vm2045, %v548
      %2056 = vst.msk [vmem:[#allocation2 + $0x50] sm:$0xff] %vm2045, %v549
      %2057 = vst.msk [vmem:[#allocation2 + $0x58] sm:$0xff] %vm2045, %v550
      %2058 = vst.msk [vmem:[#allocation2 + $0x60] sm:$0xff] %vm2045, %v551
      %2059 = vst.msk [vmem:[#allocation2 + $0x68] sm:$0xff] %vm2045, %v552
      %2060 = vst.msk [vmem:[#allocation2 + $0x70] sm:$0xff] %vm2045, %v553
      %2061 = vst.msk [vmem:[#allocation2 + $0x78] sm:$0xff] %vm2045, %v554
      %2062 = vst.msk [vmem:[#allocation2 + $0x80] sm:$0xff] %vm2045, %v555
      %2063 = vst.msk [vmem:[#allocation2 + $0x88] sm:$0xff] %vm2045, %v556
      %2064 = vst.msk [vmem:[#allocation2 + $0x90] sm:$0xff] %vm2045, %v557
      %2065 = vst.msk [vmem:[#allocation2 + $0x98] sm:$0xff] %vm2045, %v558
      %2066 = vst.msk [vmem:[#allocation2 + $0xa0] sm:$0xff] %vm2045, %v559
      %2067 = vst.msk [vmem:[#allocation2 + $0xa8] sm:$0xff] %vm2045, %v560
      %2068 = vst.msk [vmem:[#allocation2 + $0xb0] sm:$0xff] %vm2045, %v561
      %2069 = vst.msk [vmem:[#allocation2 + $0xb8] sm:$0xff] %vm2045, %v562
      %2070 = vst.msk [vmem:[#allocation2 + $0xc0] sm:$0xff] %vm2045, %v563
      %2071 = vst.msk [vmem:[#allocation2 + $0xc8] sm:$0xff] %vm2045, %v564
      %2072 = vst.msk [vmem:[#allocation2 + $0xd0] sm:$0xff] %vm2045, %v565
      %2073 = vst.msk [vmem:[#allocation2 + $0xd8] sm:$0xff] %vm2045, %v566
      %2074 = vst.msk [vmem:[#allocation2 + $0xe0] sm:$0xff] %vm2045, %v567
      %2075 = vst.msk [vmem:[#allocation2 + $0xe8] sm:$0xff] %vm2045, %v568
      %2076 = vst.msk [vmem:[#allocation2 + $0xf0] sm:$0xff] %vm2045, %v569
      %2077 = vst.msk [vmem:[#allocation2 + $0xf8] sm:$0xff] %vm2045, %v570
      %2078 = vst.msk [vmem:[#allocation3] sm:$0xff] %vm2045, %v1243
      %2079 = vst.msk [vmem:[#allocation3 + $0x8] sm:$0xff] %vm2045, %v1244
      %2080 = vst.msk [vmem:[#allocation3 + $0x10] sm:$0xff] %vm2045, %v1245
      %2081 = vst.msk [vmem:[#allocation3 + $0x18] sm:$0xff] %vm2045, %v1246
      %2082 = vst.msk [vmem:[#allocation3 + $0x20] sm:$0xff] %vm2045, %v1247
      %2083 = vst.msk [vmem:[#allocation3 + $0x28] sm:$0xff] %vm2045, %v1248
      %2084 = vst.msk [vmem:[#allocation3 + $0x30] sm:$0xff] %vm2045, %v1249
      %2085 = vst.msk [vmem:[#allocation3 + $0x38] sm:$0xff] %vm2045, %v1250
      %2086 = vst.msk [vmem:[#allocation3 + $0x40] sm:$0xff] %vm2045, %v1251
      %2087 = vst.msk [vmem:[#allocation3 + $0x48] sm:$0xff] %vm2045, %v1252
      %2088 = vst.msk [vmem:[#allocation3 + $0x50] sm:$0xff] %vm2045, %v1253
      %2089 = vst.msk [vmem:[#allocation3 + $0x58] sm:$0xff] %vm2045, %v1254
      %2090 = vst.msk [vmem:[#allocation3 + $0x60] sm:$0xff] %vm2045, %v1255
      %2091 = vst.msk [vmem:[#allocation3 + $0x68] sm:$0xff] %vm2045, %v1256
      %2092 = vst.msk [vmem:[#allocation3 + $0x70] sm:$0xff] %vm2045, %v1257
      %2093 = vst.msk [vmem:[#allocation3 + $0x78] sm:$0xff] %vm2045, %v1258
      %2094 = vst.msk [vmem:[#allocation3 + $0x80] sm:$0xff] %vm2045, %v1259
      %2095 = vst.msk [vmem:[#allocation3 + $0x88] sm:$0xff] %vm2045, %v1260
      %2096 = vst.msk [vmem:[#allocation3 + $0x90] sm:$0xff] %vm2045, %v1261
      %2097 = vst.msk [vmem:[#allocation3 + $0x98] sm:$0xff] %vm2045, %v1262
      %2098 = vst.msk [vmem:[#allocation3 + $0xa0] sm:$0xff] %vm2045, %v1263
      %2099 = vst.msk [vmem:[#allocation3 + $0xa8] sm:$0xff] %vm2045, %v1264
      %2100 = vst.msk [vmem:[#allocation3 + $0xb0] sm:$0xff] %vm2045, %v1265
      %2101 = vst.msk [vmem:[#allocation3 + $0xb8] sm:$0xff] %vm2045, %v1266
      %2102 = vst.msk [vmem:[#allocation3 + $0xc0] sm:$0xff] %vm2045, %v1267
      %2103 = vst.msk [vmem:[#allocation3 + $0xc8] sm:$0xff] %vm2045, %v1268
      %2104 = vst.msk [vmem:[#allocation3 + $0xd0] sm:$0xff] %vm2045, %v1269
      %2105 = vst.msk [vmem:[#allocation3 + $0xd8] sm:$0xff] %vm2045, %v1270
      %2106 = vst.msk [vmem:[#allocation3 + $0xe0] sm:$0xff] %vm2045, %v1271
      %2107 = vst.msk [vmem:[#allocation3 + $0xe8] sm:$0xff] %vm2045, %v1272
      %2108 = vst.msk [vmem:[#allocation3 + $0xf0] sm:$0xff] %vm2045, %v1273
      %2109 = vst.msk [vmem:[#allocation3 + $0xf8] sm:$0xff] %vm2045, %v1274
      %s2110 = smul.u32 32, %s19
      %p2111 = scmp.lt.s32.totalorder %s18, 1
      %s2112 = scalar_select %p2111, %s18, 1
      %p2113 = scmp.lt.s32.totalorder %s2110, 31
      %s2114 = scalar_select %p2113, %s2110, 31
      %s2115 = smul.addr %s2112, 32
      %s2116 = sadd.s32 %s2114, %s2115
      %s2117 = smul.addr %s2116, 8
      %s2118 = scalar_lea.vmem %s2, %s2117
      // Predicated region
      $region33: #{online-softmax} parent=27 // pred_check
        %p2119 = pneg %p110
      $region34: #{online-softmax} parent=27 // pred_check_branch
        %2121 = sbr.rel (%p2119) target = $region36
      $region35: #{online-softmax} parent=27 // pred_region
        %s2122 = smul.u32 32, %s19
      $region36: #{online-softmax} parent=27 // pred_fallthru
        _
    $region28: #{online-softmax} parent=5 // pred_fallthru
      _
    %p2123 = scmp.le.s32.totalorder 2, %s8
    // Predicated region
    $region37: #{online-softmax} parent=5 // pred_check
      %p2124 = pneg %p2123
    $region38: #{online-softmax} parent=5 // pred_check_branch
      %2126 = sbr.rel (%p2124) target = $region40
    $region39: #{online-softmax} parent=5 // pred_region
      %s2127 = ssub.s32 %s8, 2
      // Predicated region
      $region41: #{online-softmax} parent=39 // pred_check
        %p2128 = pneg %p116
      $region42: #{online-softmax} parent=39 // pred_check_branch
        %2130 = sbr.rel (%p2128) target = $region44
      $region43: #{online-softmax} parent=39 // pred_region
        %s2131 = smul.u32 32, %s22
        %p2132 = scmp.lt.s32.totalorder %s21, 1
        %s2133 = scalar_select %p2132, %s21, 1
        %p2134 = scmp.lt.s32.totalorder %s2131, 31
        %s2135 = scalar_select %p2134, %s2131, 31
        %s2136 = smul.addr %s2133, 32
        %s2137 = sadd.s32 %s2135, %s2136
        %s2138 = smul.addr %s2137, 8
        %s2139 = scalar_lea.vmem %s2, %s2138
      $region44: #{online-softmax} parent=39 // pred_fallthru
        _
    $region40: #{online-softmax} parent=5 // pred_fallthru
      _
  $region6: #{online-softmax} parent=0 // loop_footer
    %s12 = sadd.s32 1, %s8
  $region7: #{online-softmax} parent=0 // loop_footer_branch
    %7 = sbr.rel target = $region3
  $region8: #{online-softmax} parent=0 // loop_exit
    _

</llo_original>
